<compile_context>
chip_gen: v6e
topology: v6e:2x2x1
jax: 0.10.0
libtpu: 0.0.40
codegen_flags: <defaults>
</compile_context>

<pallas_src>
import functools
import math

import jax
import jax.numpy as jnp
from jax.experimental import pallas as pl
from jax.experimental.pallas import tpu as pltpu

# ----------------------------- config (small, Qwen2-like) -----------------------------
BATCH = 2
SEQ = 8
HIDDEN = 32
NUM_HEADS = 4
NUM_KV_HEADS = 2
HEAD_DIM = HIDDEN // NUM_HEADS            # 8
KV_GROUPS = NUM_HEADS // NUM_KV_HEADS     # 2
INTERMEDIATE = 64
RMS_EPS = 1e-6
ROPE_THETA = 10000.0

SEQ_TILE = 256                            # seq-rows per grid step in kernel 1 (capped at S)
ROW_TILE = 256                            # token-rows per grid step in kernel 3 (capped at B*S)
VMEM_LIMIT = 64 * 1024 * 1024
_MASK_VALUE = -0.7 * float(jnp.finfo(jnp.float32).max)   # finite "minus inf"


# ------------------------------------ kernels -----------------------------------------
def rmsnorm_qkv_rope_kernel(x_ref, g_ref, w_ref, b_ref, cos_ref, sin_ref, o_ref, *, eps, dh):
    # x: (TS, D) f32   g: (1, D) f32   w: (D, N) bf16   b: (1, N) f32
    # cos/sin: (TS, N) f32 full-width tables (identity on V columns, Q columns pre-scaled)
    x = x_ref[...].astype(jnp.float32)
    ms = jnp.mean(x * x, axis=-1, keepdims=True)
    xn = (x * jax.lax.rsqrt(ms + eps) * g_ref[...]).astype(jnp.bfloat16)   # downcast at MXU input
    acc = jnp.dot(xn, w_ref[...], preferred_element_type=jnp.float32) + b_ref[...]

    # Per-head half-rotation of the whole Q|K|V slab (V is identity via cos=1, sin=0):
    #   out = x*cos + swap_within_head(x)*sin_signed
    # swap_within_head built from two slab-wide lane shifts + one select (never reads
    # across a head boundary because head boundaries are Dh-periodic).
    half = dh // 2
    rolled_fwd = jnp.concatenate([acc[:, -half:], acc[:, :-half]], axis=-1)   # shift +half
    rolled_bwd = jnp.concatenate([acc[:, half:], acc[:, :half]], axis=-1)     # shift -half
    lane = jax.lax.broadcasted_iota(jnp.int32, acc.shape, 1)
    swapped = jnp.where((lane % dh) < half, rolled_bwd, rolled_fwd)
    o_ref[...] = (acc * cos_ref[...] + swapped * sin_ref[...]).astype(o_ref.dtype)


def gqa_attn_kernel(qkv_ref, bias_ref, o_ref, *, heads, kvh, groups, dh):
    # qkv: (S, (H+2*KVH)*Dh) bf16, Q already RoPE'd + pre-scaled, K RoPE'd.
    # bias: (S, S) f32 additive causal mask (0 / large negative).
    qkv = qkv_ref[...]
    bias = bias_ref[...]
    k_off = heads * dh
    v_off = k_off + kvh * dh
    dn = (((1,), (1,)), ((), ()))          # contract last dims -> (S, S); no k.T transpose
    outs = []
    # TODO(synk): at real GQA sizes, batch the group loop into one contraction and tile
    #             the KV axis flash-style with online softmax + causal block skipping.
    for n in range(kvh):                   # K/V head stays live across its query group
        k_h = qkv[:, k_off + n * dh: k_off + (n + 1) * dh]
        v_h = qkv[:, v_off + n * dh: v_off + (n + 1) * dh]
        for g in range(groups):
            h = n * groups + g
            q_h = qkv[:, h * dh: (h + 1) * dh]
            s = jax.lax.dot_general(q_h, k_h, dn, preferred_element_type=jnp.float32) + bias
            m = jnp.max(s, axis=-1, keepdims=True)
            p = jnp.exp(s - m)
            p = p * pl.reciprocal(jnp.sum(p, axis=-1, keepdims=True), approx=True)
            outs.append(jnp.dot(p.astype(qkv.dtype), v_h, preferred_element_type=jnp.float32))
    o_ref[...] = jnp.concatenate(outs, axis=-1).astype(o_ref.dtype)


def oproj_mlp_kernel(a_ref, wo_ref, r_ref, g_ref, wgu_ref, wd_ref, o_ref, *, eps, inter):
    # a: (TM, H*Dh) bf16  wo: (H*Dh, D) bf16  r: (TM, D) f32  wgu: (D, 2I) bf16  wd: (I, D) bf16
    x1 = jnp.dot(a_ref[...], wo_ref[...], preferred_element_type=jnp.float32) \
         + r_ref[...].astype(jnp.float32)                                   # o_proj + residual
    ms = jnp.mean(x1 * x1, axis=-1, keepdims=True)
    h = (x1 * jax.lax.rsqrt(ms + eps) * g_ref[...]).astype(jnp.bfloat16)    # post-attn RMSNorm
    gu = jnp.dot(h, wgu_ref[...], preferred_element_type=jnp.float32)       # gate|up fused matmul
    gate = gu[:, :inter]
    up = gu[:, inter:]
    act = (gate * jax.nn.sigmoid(gate) * up).astype(jnp.bfloat16)           # SiLU(gate) * up
    out = jnp.dot(act, wd_ref[...], preferred_element_type=jnp.float32) + x1
    o_ref[...] = out.astype(o_ref.dtype)


# ------------------------------------ wrappers -----------------------------------------
def fused_rmsnorm_qkv_rope(x, gamma, w_qkv, b_qkv, cos_t, sin_t):
    B, S, D = x.shape
    N = w_qkv.shape[1]
    ts = min(SEQ_TILE, S)
    return pl.pallas_call(
        functools.partial(rmsnorm_qkv_rope_kernel, eps=RMS_EPS, dh=HEAD_DIM),
        out_shape=jax.ShapeDtypeStruct((B, S, N), jnp.bfloat16),
        grid=(B, S // ts),
        in_specs=[
            pl.BlockSpec((None, ts, D), lambda b, s: (b, s, 0)),
            pl.BlockSpec((1, D), lambda b, s: (0, 0)),
            pl.BlockSpec((D, N), lambda b, s: (0, 0)),      # full weight block (bf16); K/N-tile at real dims
            pl.BlockSpec((1, N), lambda b, s: (0, 0)),
            pl.BlockSpec((ts, N), lambda b, s: (s, 0)),
            pl.BlockSpec((ts, N), lambda b, s: (s, 0)),
        ],
        out_specs=pl.BlockSpec((None, ts, N), lambda b, s: (b, s, 0)),
        compiler_params=pltpu.CompilerParams(
            dimension_semantics=("parallel", "parallel"),
            vmem_limit_bytes=VMEM_LIMIT),
    )(x, gamma.reshape(1, D), w_qkv, b_qkv.reshape(1, N), cos_t, sin_t)


def gqa_attention(qkv, causal_bias):
    B, S, N = qkv.shape
    HD = NUM_HEADS * HEAD_DIM
    kernel = functools.partial(gqa_attn_kernel, heads=NUM_HEADS, kvh=NUM_KV_HEADS,
                               groups=KV_GROUPS, dh=HEAD_DIM)
    return pl.pallas_call(
        kernel,
        out_shape=jax.ShapeDtypeStruct((B, S, HD), jnp.bfloat16),
        grid=(B,),
        in_specs=[
            pl.BlockSpec((None, S, N), lambda b: (b, 0, 0)),   # full-extent qkv slab, lane-dense
            pl.BlockSpec((S, S), lambda b: (0, 0)),
        ],
        out_specs=pl.BlockSpec((None, S, HD), lambda b: (b, 0, 0)),
        compiler_params=pltpu.CompilerParams(
            dimension_semantics=("parallel",), vmem_limit_bytes=VMEM_LIMIT),
    )(qkv, causal_bias)


def oproj_mlp(attn2d, wo, res2d, gamma, w_gu, wd):
    M, HD = attn2d.shape
    D = wo.shape[1]
    I2 = w_gu.shape[1]
    tm = min(ROW_TILE, M)
    return pl.pallas_call(
        functools.partial(oproj_mlp_kernel, eps=RMS_EPS, inter=I2 // 2),
        out_shape=jax.ShapeDtypeStruct((M, D), jnp.float32),
        grid=(M // tm,),
        in_specs=[
            pl.BlockSpec((tm, HD), lambda i: (i, 0)),
            pl.BlockSpec((HD, D), lambda i: (0, 0)),
            pl.BlockSpec((tm, D), lambda i: (i, 0)),
            pl.BlockSpec((1, D), lambda i: (0, 0)),
            pl.BlockSpec((D, I2), lambda i: (0, 0)),     # full weight blocks; K/N-tile + acc at real dims
            pl.BlockSpec((I2 // 2, D), lambda i: (0, 0)),
        ],
        out_specs=pl.BlockSpec((tm, D), lambda i: (i, 0)),
        compiler_params=pltpu.CompilerParams(
            dimension_semantics=("parallel",), vmem_limit_bytes=VMEM_LIMIT),
    )(attn2d, wo, res2d, gamma.reshape(1, D), w_gu, wd)


# -------------------------------- decoder layer forward --------------------------------
def qwen2_decoder_layer(x, params, cos_t, sin_t, causal_bias):
    B, S, D = x.shape
    qkv = fused_rmsnorm_qkv_rope(x, params["input_ln_w"], params["w_qkv_bf16"],
                                 params["b_qkv"], cos_t, sin_t)            # (B,S,(H+2KVH)*Dh) bf16
    attn = gqa_attention(qkv, causal_bias)                                 # (B,S,H*Dh) bf16
    out2d = oproj_mlp(attn.reshape(B * S, -1), params["wo_bf16"],
                      x.reshape(B * S, D), params["post_ln_w"],
                      params["w_gu_bf16"], params["wd_bf16"])              # (B*S, D) f32
    return out2d.reshape(B, S, D)


# ----------------------------------- params / RoPE --------------------------------------
def _init_params(key):
    ks = jax.random.split(key, 8)
    scale = 0.05
    p = {
        "input_ln_w": jnp.ones((HIDDEN,), jnp.float32),
        "post_ln_w": jnp.ones((HIDDEN,), jnp.float32),
        # f32 master weights, stored pre-transposed as (in_features, out_features)
        "wq": scale * jax.random.normal(ks[0], (HIDDEN, NUM_HEADS * HEAD_DIM), jnp.float32),
        "bq": scale * jax.random.normal(ks[1], (NUM_HEADS * HEAD_DIM,), jnp.float32),
        "wk": scale * jax.random.normal(ks[2], (HIDDEN, NUM_KV_HEADS * HEAD_DIM), jnp.float32),
        "bk": scale * jax.random.normal(ks[3], (NUM_KV_HEADS * HEAD_DIM,), jnp.float32),
        "wv": scale * jax.random.normal(ks[4], (HIDDEN, NUM_KV_HEADS * HEAD_DIM), jnp.float32),
        "bv": scale * jax.random.normal(ks[5], (NUM_KV_HEADS * HEAD_DIM,), jnp.float32),
        "wo": scale * jax.random.normal(ks[6], (NUM_HEADS * HEAD_DIM, HIDDEN), jnp.float32),
        "wg": scale * jax.random.normal(ks[7], (HIDDEN, INTERMEDIATE), jnp.float32),
        "wu": scale * jax.random.normal(jax.random.fold_in(key, 100), (HIDDEN, INTERMEDIATE), jnp.float32),
        "wd": scale * jax.random.normal(jax.random.fold_in(key, 101), (INTERMEDIATE, HIDDEN), jnp.float32),
    }
    # one-time weight fusion + bf16 cast (done once per model, outside the hot path)
    p["w_qkv_bf16"] = jnp.concatenate([p["wq"], p["wk"], p["wv"]], axis=1).astype(jnp.bfloat16)
    p["b_qkv"] = jnp.concatenate([p["bq"], p["bk"], p["bv"]])
    p["wo_bf16"] = p["wo"].astype(jnp.bfloat16)
    p["w_gu_bf16"] = jnp.concatenate([p["wg"], p["wu"]], axis=1).astype(jnp.bfloat16)
    p["wd_bf16"] = p["wd"].astype(jnp.bfloat16)
    return p


def _rope_tables(seq_len, head_dim, theta):
    inv_freq = 1.0 / (theta ** (jnp.arange(0, head_dim, 2, dtype=jnp.float32) / head_dim))
    t = jnp.arange(seq_len, dtype=jnp.float32)
    ang = jnp.outer(t, inv_freq)          # (S, head_dim//2) == angle of freqs_cis
    return jnp.cos(ang), jnp.sin(ang)


def _build_fused_rope_tables(cos, sin, *, scale):
    """Full-width cos / signed-sin tables covering the Q|K|V column layout.

    Q columns additionally carry the 1/sqrt(Dh) attention scale; V columns are the
    identity (cos=1, sin=0) so the whole projection slab can be rotated in one shot.
    """
    cos_h = jnp.concatenate([cos, cos], axis=-1)          # (S, Dh)
    sin_h = jnp.concatenate([-sin, sin], axis=-1)         # (S, Dh), signed for the half-swap
    ones_h = jnp.ones_like(cos_h)
    zeros_h = jnp.zeros_like(cos_h)
    cos_t = jnp.concatenate(
        [jnp.tile(cos_h * scale, (1, NUM_HEADS)),
         jnp.tile(cos_h, (1, NUM_KV_HEADS)),
         jnp.tile(ones_h, (1, NUM_KV_HEADS))], axis=-1)
    sin_t = jnp.concatenate(
        [jnp.tile(sin_h * scale, (1, NUM_HEADS)),
         jnp.tile(sin_h, (1, NUM_KV_HEADS)),
         jnp.tile(zeros_h, (1, NUM_KV_HEADS))], axis=-1)
    return cos_t.astype(jnp.float32), sin_t.astype(jnp.float32)


def _causal_bias(seq_len):
    mask = jnp.tril(jnp.ones((seq_len, seq_len), bool))
    return jnp.where(mask, 0.0, _MASK_VALUE).astype(jnp.float32)


# ------------------------------ pure-JAX reference --------------------------------------
def _reference_layer(x, params, cos, sin):
    B, S, D = x.shape

    def rms(v, w):
        ms = jnp.mean(v * v, axis=-1, keepdims=True)
        return v * jax.lax.rsqrt(ms + RMS_EPS) * w

    res = x
    xn = rms(x, params["input_ln_w"])
    q = (xn @ params["wq"] + params["bq"]).reshape(B, S, NUM_HEADS, HEAD_DIM)
    k = (xn @ params["wk"] + params["bk"]).reshape(B, S, NUM_KV_HEADS, HEAD_DIM)
    v = (xn @ params["wv"] + params["bv"]).reshape(B, S, NUM_KV_HEADS, HEAD_DIM)

    half = HEAD_DIM // 2
    c = cos[None, :, None, :]
    s = sin[None, :, None, :]

    def rope(t):
        t1, t2 = t[..., :half], t[..., half:]
        return jnp.concatenate([t1 * c - t2 * s, t1 * s + t2 * c], axis=-1)

    q, k = rope(q), rope(k)
    k = jnp.repeat(k, KV_GROUPS, axis=2)
    v = jnp.repeat(v, KV_GROUPS, axis=2)
    scores = jnp.einsum("bqhd,bkhd->bhqk", q, k) / math.sqrt(HEAD_DIM)
    mask = jnp.tril(jnp.ones((S, S), bool))
    scores = jnp.where(mask, scores, -jnp.inf)
    p = jax.nn.softmax(scores, axis=-1)
    attn = jnp.einsum("bhqk,bkhd->bqhd", p, v).reshape(B, S, -1)

    x1 = res + attn @ params["wo"]
    h = rms(x1, params["post_ln_w"])
    g = h @ params["wg"]
    u = h @ params["wu"]
    return x1 + (g * jax.nn.sigmoid(g) * u) @ params["wd"]


# --------------------------------------- main -------------------------------------------
if __name__ == "__main__":
    key = jax.random.PRNGKey(0)
    k_in, k_par = jax.random.split(key)

    x = jax.random.normal(k_in, (BATCH, SEQ, HIDDEN), jnp.float32)
    params = _init_params(k_par)
    cos, sin = _rope_tables(SEQ, HEAD_DIM, ROPE_THETA)
    cos_t, sin_t = _build_fused_rope_tables(cos, sin, scale=1.0 / math.sqrt(HEAD_DIM))
    causal_bias = _causal_bias(SEQ)

    layer = jax.jit(qwen2_decoder_layer)
    out = jax.block_until_ready(layer(x, params, cos_t, sin_t, causal_bias))

    assert out.shape == (BATCH, SEQ, HIDDEN)
    assert bool(jnp.all(jnp.isfinite(out)))

    ref = _reference_layer(x, params, cos, sin)
    # tolerance accounts for bf16 weights / MXU operands (f32 master weights in the reference)
    assert bool(jnp.allclose(out, ref, rtol=2e-2, atol=2e-2)), "mismatch vs JAX reference"

    print("KERNEL_OK")
</pallas_src>

<mosaic_0001>
module attributes {stable_mosaic.version = 11 : i64} {
  func.func @gqa_attn_kernel(%arg0: i32, %arg1: memref<1x8x64xbf16, #tpu.memory_space<vmem>>, %arg2: memref<8x8xf32, #tpu.memory_space<vmem>>, %arg3: memref<1x8x32xbf16, #tpu.memory_space<vmem>>) attributes {dimension_semantics = [#tpu.dimension_semantics<parallel>], iteration_bounds = array<i64: 2>, scalar_prefetch = 0 : i64, scratch_operands = 0 : i64, tpu.core_type = #tpu.core_type<tc>, window_params = [{transform_indices = @transform_0, window_bounds = array<i64: 1, 8, 64>}, {pipeline_mode = #tpu.pipeline_mode<synchronous>, transform_indices = @transform_1, window_bounds = array<i64: 8, 8>}, {transform_indices = @transform_2, window_bounds = array<i64: 1, 8, 32>}]} {
    %c0 = arith.constant 0 : index
    %c0_0 = arith.constant 0 : index
    %c0_1 = arith.constant 0 : index
    %0 = vector.load %arg1[%c0, %c0_0, %c0_1] : memref<1x8x64xbf16, #tpu.memory_space<vmem>>, vector<1x8x64xbf16>
    %1 = vector.shape_cast %0 : vector<1x8x64xbf16> to vector<8x64xbf16>
    %c0_2 = arith.constant 0 : index
    %c0_3 = arith.constant 0 : index
    %2 = vector.load %arg2[%c0_2, %c0_3] : memref<8x8xf32, #tpu.memory_space<vmem>>, vector<8x8xf32>
    %3 = vector.extract_strided_slice %1 {offsets = [0, 32], sizes = [8, 8], strides = [1, 1]} : vector<8x64xbf16> to vector<8x8xbf16>
    %4 = vector.extract_strided_slice %1 {offsets = [0, 48], sizes = [8, 8], strides = [1, 1]} : vector<8x64xbf16> to vector<8x8xbf16>
    %5 = vector.extract_strided_slice %1 {offsets = [0, 0], sizes = [8, 8], strides = [1, 1]} : vector<8x64xbf16> to vector<8x8xbf16>
    %cst = arith.constant dense<0.000000e+00> : vector<8x8xf32>
    %6 = tpu.matmul %5, %3, %cst {dimension_numbers = #tpu.dot_dimension_numbers<[1], [1], [0], [0], [0, 0, 1, 0], [], []>} : vector<8x8xbf16>, vector<8x8xbf16>, vector<8x8xf32> -> vector<8x8xf32>
    %7 = arith.addf %6, %2 : vector<8x8xf32>
    %cst_4 = arith.constant dense<0xFF800000> : vector<8xf32>
    %8 = vector.multi_reduction <maximumf>, %7, %cst_4 [1] : vector<8x8xf32> to vector<8xf32>
    %9 = vector.shape_cast %8 : vector<8xf32> to vector<8x1xf32>
    %10 = vector.broadcast %9 : vector<8x1xf32> to vector<8x8xf32>
    %11 = arith.subf %7, %10 : vector<8x8xf32>
    %12 = math.exp %11 : vector<8x8xf32>
    %cst_5 = arith.constant dense<0.000000e+00> : vector<8xf32>
    %13 = vector.multi_reduction <add>, %12, %cst_5 [1] : vector<8x8xf32> to vector<8xf32>
    %14 = vector.shape_cast %13 : vector<8xf32> to vector<8x1xf32>
    %15 = tpu.reciprocal %14 {approx = true} : vector<8x1xf32> -> vector<8x1xf32>
    %16 = vector.broadcast %15 : vector<8x1xf32> to vector<8x8xf32>
    %17 = arith.mulf %12, %16 : vector<8x8xf32>
    %18 = arith.truncf %17 : vector<8x8xf32> to vector<8x8xbf16>
    %cst_6 = arith.constant dense<0.000000e+00> : vector<8x8xf32>
    %19 = tpu.matmul %18, %4, %cst_6 {dimension_numbers = #tpu.dot_dimension_numbers<[1], [0], [0], [1], [0, 0, 1, 1], [], []>} : vector<8x8xbf16>, vector<8x8xbf16>, vector<8x8xf32> -> vector<8x8xf32>
    %20 = vector.extract_strided_slice %1 {offsets = [0, 8], sizes = [8, 8], strides = [1, 1]} : vector<8x64xbf16> to vector<8x8xbf16>
    %cst_7 = arith.constant dense<0.000000e+00> : vector<8x8xf32>
    %21 = tpu.matmul %20, %3, %cst_7 {dimension_numbers = #tpu.dot_dimension_numbers<[1], [1], [0], [0], [0, 0, 1, 0], [], []>} : vector<8x8xbf16>, vector<8x8xbf16>, vector<8x8xf32> -> vector<8x8xf32>
    %22 = arith.addf %21, %2 : vector<8x8xf32>
    %cst_8 = arith.constant dense<0xFF800000> : vector<8xf32>
    %23 = vector.multi_reduction <maximumf>, %22, %cst_8 [1] : vector<8x8xf32> to vector<8xf32>
    %24 = vector.shape_cast %23 : vector<8xf32> to vector<8x1xf32>
    %25 = vector.broadcast %24 : vector<8x1xf32> to vector<8x8xf32>
    %26 = arith.subf %22, %25 : vector<8x8xf32>
    %27 = math.exp %26 : vector<8x8xf32>
    %cst_9 = arith.constant dense<0.000000e+00> : vector<8xf32>
    %28 = vector.multi_reduction <add>, %27, %cst_9 [1] : vector<8x8xf32> to vector<8xf32>
    %29 = vector.shape_cast %28 : vector<8xf32> to vector<8x1xf32>
    %30 = tpu.reciprocal %29 {approx = true} : vector<8x1xf32> -> vector<8x1xf32>
    %31 = vector.broadcast %30 : vector<8x1xf32> to vector<8x8xf32>
    %32 = arith.mulf %27, %31 : vector<8x8xf32>
    %33 = arith.truncf %32 : vector<8x8xf32> to vector<8x8xbf16>
    %cst_10 = arith.constant dense<0.000000e+00> : vector<8x8xf32>
    %34 = tpu.matmul %33, %4, %cst_10 {dimension_numbers = #tpu.dot_dimension_numbers<[1], [0], [0], [1], [0, 0, 1, 1], [], []>} : vector<8x8xbf16>, vector<8x8xbf16>, vector<8x8xf32> -> vector<8x8xf32>
    %35 = vector.extract_strided_slice %1 {offsets = [0, 40], sizes = [8, 8], strides = [1, 1]} : vector<8x64xbf16> to vector<8x8xbf16>
    %36 = vector.extract_strided_slice %1 {offsets = [0, 56], sizes = [8, 8], strides = [1, 1]} : vector<8x64xbf16> to vector<8x8xbf16>
    %37 = vector.extract_strided_slice %1 {offsets = [0, 16], sizes = [8, 8], strides = [1, 1]} : vector<8x64xbf16> to vector<8x8xbf16>
    %cst_11 = arith.constant dense<0.000000e+00> : vector<8x8xf32>
    %38 = tpu.matmul %37, %35, %cst_11 {dimension_numbers = #tpu.dot_dimension_numbers<[1], [1], [0], [0], [0, 0, 1, 0], [], []>} : vector<8x8xbf16>, vector<8x8xbf16>, vector<8x8xf32> -> vector<8x8xf32>
    %39 = arith.addf %38, %2 : vector<8x8xf32>
    %cst_12 = arith.constant dense<0xFF800000> : vector<8xf32>
    %40 = vector.multi_reduction <maximumf>, %39, %cst_12 [1] : vector<8x8xf32> to vector<8xf32>
    %41 = vector.shape_cast %40 : vector<8xf32> to vector<8x1xf32>
    %42 = vector.broadcast %41 : vector<8x1xf32> to vector<8x8xf32>
    %43 = arith.subf %39, %42 : vector<8x8xf32>
    %44 = math.exp %43 : vector<8x8xf32>
    %cst_13 = arith.constant dense<0.000000e+00> : vector<8xf32>
    %45 = vector.multi_reduction <add>, %44, %cst_13 [1] : vector<8x8xf32> to vector<8xf32>
    %46 = vector.shape_cast %45 : vector<8xf32> to vector<8x1xf32>
    %47 = tpu.reciprocal %46 {approx = true} : vector<8x1xf32> -> vector<8x1xf32>
    %48 = vector.broadcast %47 : vector<8x1xf32> to vector<8x8xf32>
    %49 = arith.mulf %44, %48 : vector<8x8xf32>
    %50 = arith.truncf %49 : vector<8x8xf32> to vector<8x8xbf16>
    %cst_14 = arith.constant dense<0.000000e+00> : vector<8x8xf32>
    %51 = tpu.matmul %50, %36, %cst_14 {dimension_numbers = #tpu.dot_dimension_numbers<[1], [0], [0], [1], [0, 0, 1, 1], [], []>} : vector<8x8xbf16>, vector<8x8xbf16>, vector<8x8xf32> -> vector<8x8xf32>
    %52 = vector.extract_strided_slice %1 {offsets = [0, 24], sizes = [8, 8], strides = [1, 1]} : vector<8x64xbf16> to vector<8x8xbf16>
    %cst_15 = arith.constant dense<0.000000e+00> : vector<8x8xf32>
    %53 = tpu.matmul %52, %35, %cst_15 {dimension_numbers = #tpu.dot_dimension_numbers<[1], [1], [0], [0], [0, 0, 1, 0], [], []>} : vector<8x8xbf16>, vector<8x8xbf16>, vector<8x8xf32> -> vector<8x8xf32>
    %54 = arith.addf %53, %2 : vector<8x8xf32>
    %cst_16 = arith.constant dense<0xFF800000> : vector<8xf32>
    %55 = vector.multi_reduction <maximumf>, %54, %cst_16 [1] : vector<8x8xf32> to vector<8xf32>
    %56 = vector.shape_cast %55 : vector<8xf32> to vector<8x1xf32>
    %57 = vector.broadcast %56 : vector<8x1xf32> to vector<8x8xf32>
    %58 = arith.subf %54, %57 : vector<8x8xf32>
    %59 = math.exp %58 : vector<8x8xf32>
    %cst_17 = arith.constant dense<0.000000e+00> : vector<8xf32>
    %60 = vector.multi_reduction <add>, %59, %cst_17 [1] : vector<8x8xf32> to vector<8xf32>
    %61 = vector.shape_cast %60 : vector<8xf32> to vector<8x1xf32>
    %62 = tpu.reciprocal %61 {approx = true} : vector<8x1xf32> -> vector<8x1xf32>
    %63 = vector.broadcast %62 : vector<8x1xf32> to vector<8x8xf32>
    %64 = arith.mulf %59, %63 : vector<8x8xf32>
    %65 = arith.truncf %64 : vector<8x8xf32> to vector<8x8xbf16>
    %cst_18 = arith.constant dense<0.000000e+00> : vector<8x8xf32>
    %66 = tpu.matmul %65, %36, %cst_18 {dimension_numbers = #tpu.dot_dimension_numbers<[1], [0], [0], [1], [0, 0, 1, 1], [], []>} : vector<8x8xbf16>, vector<8x8xbf16>, vector<8x8xf32> -> vector<8x8xf32>
    %67 = tpu.concatenate %19, %34, %51, %66 in 1 : vector<8x8xf32>, vector<8x8xf32>, vector<8x8xf32>, vector<8x8xf32> -> vector<8x32xf32>
    %68 = arith.truncf %67 : vector<8x32xf32> to vector<8x32xbf16>
    %c0_19 = arith.constant 0 : index
    %c0_20 = arith.constant 0 : index
    %c0_21 = arith.constant 0 : index
    %69 = vector.load %arg3[%c0_19, %c0_20, %c0_21] : memref<1x8x32xbf16, #tpu.memory_space<vmem>>, vector<1x8x32xbf16>
    %70 = vector.shape_cast %69 : vector<1x8x32xbf16> to vector<8x32xbf16>
    %71 = vector.shape_cast %68 : vector<8x32xbf16> to vector<1x8x32xbf16>
    tpu.vector_store %arg3[%c0_19, %c0_20, %c0_21], %71 {strides = array<i32>} : memref<1x8x32xbf16, #tpu.memory_space<vmem>>, vector<1x8x32xbf16>,
    return
  }
  func.func @transform_0(%arg0: i32) -> (i32, i32, i32) {
    %c0_i32 = arith.constant 0 : i32
    %c0_i32_0 = arith.constant 0 : i32
    %c0_i32_1 = arith.constant 0 : i32
    return %arg0, %c0_i32, %c0_i32_0 : i32, i32, i32
  }
  func.func @transform_1(%arg0: i32) -> (i32, i32) {
    %c0_i32 = arith.constant 0 : i32
    %c0_i32_0 = arith.constant 0 : i32
    %c0_i32_1 = arith.constant 0 : i32
    return %c0_i32, %c0_i32_0 : i32, i32
  }
  func.func @transform_2(%arg0: i32) -> (i32, i32, i32) {
    %c0_i32 = arith.constant 0 : i32
    %c0_i32_0 = arith.constant 0 : i32
    %c0_i32_1 = arith.constant 0 : i32
    return %arg0, %c0_i32, %c0_i32_0 : i32, i32, i32
  }
}

module attributes {stable_mosaic.version = 11 : i64} {
  func.func @oproj_mlp_kernel(%arg0: i32, %arg1: memref<16x32xbf16, #tpu.memory_space<vmem>>, %arg2: memref<32x32xbf16, #tpu.memory_space<vmem>>, %arg3: memref<16x32xf32, #tpu.memory_space<vmem>>, %arg4: memref<1x32xf32, #tpu.memory_space<vmem>>, %arg5: memref<32x128xbf16, #tpu.memory_space<vmem>>, %arg6: memref<64x32xbf16, #tpu.memory_space<vmem>>, %arg7: memref<16x32xf32, #tpu.memory_space<vmem>>) attributes {dimension_semantics = [#tpu.dimension_semantics<parallel>], iteration_bounds = array<i64: 1>, scalar_prefetch = 0 : i64, scratch_operands = 0 : i64, tpu.core_type = #tpu.core_type<tc>, window_params = [{transform_indices = @transform_0, window_bounds = array<i64: 16, 32>}, {pipeline_mode = #tpu.pipeline_mode<synchronous>, transform_indices = @transform_1, window_bounds = array<i64: 32, 32>}, {transform_indices = @transform_2, window_bounds = array<i64: 16, 32>}, {pipeline_mode = #tpu.pipeline_mode<synchronous>, transform_indices = @transform_3, window_bounds = array<i64: 1, 32>}, {pipeline_mode = #tpu.pipeline_mode<synchronous>, transform_indices = @transform_4, window_bounds = array<i64: 32, 128>}, {pipeline_mode = #tpu.pipeline_mode<synchronous>, transform_indices = @transform_5, window_bounds = array<i64: 64, 32>}, {transform_indices = @transform_6, window_bounds = array<i64: 16, 32>}]} {
    %c0 = arith.constant 0 : index
    %c0_0 = arith.constant 0 : index
    %0 = vector.load %arg1[%c0, %c0_0] : memref<16x32xbf16, #tpu.memory_space<vmem>>, vector<16x32xbf16>
    %c0_1 = arith.constant 0 : index
    %c0_2 = arith.constant 0 : index
    %1 = vector.load %arg2[%c0_1, %c0_2] : memref<32x32xbf16, #tpu.memory_space<vmem>>, vector<32x32xbf16>
    %cst = arith.constant dense<0.000000e+00> : vector<16x32xf32>
    %2 = tpu.matmul %0, %1, %cst {dimension_numbers = #tpu.dot_dimension_numbers<[1], [0], [0], [1], [0, 0, 1, 1], [], []>} : vector<16x32xbf16>, vector<32x32xbf16>, vector<16x32xf32> -> vector<16x32xf32>
    %c0_3 = arith.constant 0 : index
    %c0_4 = arith.constant 0 : index
    %3 = vector.load %arg3[%c0_3, %c0_4] : memref<16x32xf32, #tpu.memory_space<vmem>>, vector<16x32xf32>
    %4 = arith.addf %2, %3 : vector<16x32xf32>
    %5 = arith.mulf %4, %4 : vector<16x32xf32>
    %cst_5 = arith.constant dense<0.000000e+00> : vector<16xf32>
    %6 = vector.multi_reduction <add>, %5, %cst_5 [1] : vector<16x32xf32> to vector<16xf32>
    %7 = vector.shape_cast %6 : vector<16xf32> to vector<16x1xf32>
    %cst_6 = arith.constant 3.200000e+01 : f32
    %8 = vector.broadcast %cst_6 : f32 to vector<16x1xf32>
    %9 = arith.divf %7, %8 : vector<16x1xf32>
    %cst_7 = arith.constant 9.99999997E-7 : f32
    %10 = vector.broadcast %cst_7 : f32 to vector<16x1xf32>
    %11 = arith.addf %9, %10 : vector<16x1xf32>
    %12 = math.rsqrt %11 : vector<16x1xf32>
    %13 = vector.broadcast %12 : vector<16x1xf32> to vector<16x32xf32>
    %14 = arith.mulf %4, %13 : vector<16x32xf32>
    %c0_8 = arith.constant 0 : index
    %c0_9 = arith.constant 0 : index
    %15 = vector.load %arg4[%c0_8, %c0_9] : memref<1x32xf32, #tpu.memory_space<vmem>>, vector<1x32xf32>
    %16 = vector.broadcast %15 : vector<1x32xf32> to vector<16x32xf32>
    %17 = arith.mulf %14, %16 : vector<16x32xf32>
    %18 = arith.truncf %17 : vector<16x32xf32> to vector<16x32xbf16>
    %c0_10 = arith.constant 0 : index
    %c0_11 = arith.constant 0 : index
    %19 = vector.load %arg5[%c0_10, %c0_11] : memref<32x128xbf16, #tpu.memory_space<vmem>>, vector<32x128xbf16>
    %cst_12 = arith.constant dense<0.000000e+00> : vector<16x128xf32>
    %20 = tpu.matmul %18, %19, %cst_12 {dimension_numbers = #tpu.dot_dimension_numbers<[1], [0], [0], [1], [0, 0, 1, 1], [], []>} : vector<16x32xbf16>, vector<32x128xbf16>, vector<16x128xf32> -> vector<16x128xf32>
    %21 = vector.extract_strided_slice %20 {offsets = [0, 0], sizes = [16, 64], strides = [1, 1]} : vector<16x128xf32> to vector<16x64xf32>
    %22 = vector.extract_strided_slice %20 {offsets = [0, 64], sizes = [16, 64], strides = [1, 1]} : vector<16x128xf32> to vector<16x64xf32>
    %23 = arith.negf %21 : vector<16x64xf32>
    %24 = math.exp %23 : vector<16x64xf32>
    %cst_13 = arith.constant 1.000000e+00 : f32
    %25 = vector.broadcast %cst_13 : f32 to vector<16x64xf32>
    %26 = arith.addf %25, %24 : vector<16x64xf32>
    %27 = arith.divf %25, %26 : vector<16x64xf32>
    %28 = arith.mulf %21, %27 : vector<16x64xf32>
    %29 = arith.mulf %28, %22 : vector<16x64xf32>
    %30 = arith.truncf %29 : vector<16x64xf32> to vector<16x64xbf16>
    %c0_14 = arith.constant 0 : index
    %c0_15 = arith.constant 0 : index
    %31 = vector.load %arg6[%c0_14, %c0_15] : memref<64x32xbf16, #tpu.memory_space<vmem>>, vector<64x32xbf16>
    %cst_16 = arith.constant dense<0.000000e+00> : vector<16x32xf32>
    %32 = tpu.matmul %30, %31, %cst_16 {dimension_numbers = #tpu.dot_dimension_numbers<[1], [0], [0], [1], [0, 0, 1, 1], [], []>} : vector<16x64xbf16>, vector<64x32xbf16>, vector<16x32xf32> -> vector<16x32xf32>
    %33 = arith.addf %32, %4 : vector<16x32xf32>
    %c0_17 = arith.constant 0 : index
    %c0_18 = arith.constant 0 : index
    %34 = vector.load %arg7[%c0_17, %c0_18] : memref<16x32xf32, #tpu.memory_space<vmem>>, vector<16x32xf32>
    tpu.vector_store %arg7[%c0_17, %c0_18], %33 {strides = array<i32>} : memref<16x32xf32, #tpu.memory_space<vmem>>, vector<16x32xf32>,
    return
  }
  func.func @transform_0(%arg0: i32) -> (i32, i32) {
    %c0_i32 = arith.constant 0 : i32
    %c0_i32_0 = arith.constant 0 : i32
    return %arg0, %c0_i32 : i32, i32
  }
  func.func @transform_1(%arg0: i32) -> (i32, i32) {
    %c0_i32 = arith.constant 0 : i32
    %c0_i32_0 = arith.constant 0 : i32
    %c0_i32_1 = arith.constant 0 : i32
    return %c0_i32, %c0_i32_0 : i32, i32
  }
  func.func @transform_2(%arg0: i32) -> (i32, i32) {
    %c0_i32 = arith.constant 0 : i32
    %c0_i32_0 = arith.constant 0 : i32
    return %arg0, %c0_i32 : i32, i32
  }
  func.func @transform_3(%arg0: i32) -> (i32, i32) {
    %c0_i32 = arith.constant 0 : i32
    %c0_i32_0 = arith.constant 0 : i32
    %c0_i32_1 = arith.constant 0 : i32
    return %c0_i32, %c0_i32_0 : i32, i32
  }
  func.func @transform_4(%arg0: i32) -> (i32, i32) {
    %c0_i32 = arith.constant 0 : i32
    %c0_i32_0 = arith.constant 0 : i32
    %c0_i32_1 = arith.constant 0 : i32
    return %c0_i32, %c0_i32_0 : i32, i32
  }
  func.func @transform_5(%arg0: i32) -> (i32, i32) {
    %c0_i32 = arith.constant 0 : i32
    %c0_i32_0 = arith.constant 0 : i32
    %c0_i32_1 = arith.constant 0 : i32
    return %c0_i32, %c0_i32_0 : i32, i32
  }
  func.func @transform_6(%arg0: i32) -> (i32, i32) {
    %c0_i32 = arith.constant 0 : i32
    %c0_i32_0 = arith.constant 0 : i32
    return %arg0, %c0_i32 : i32, i32
  }
}

module attributes {stable_mosaic.version = 11 : i64} {
  func.func @rmsnorm_qkv_rope_kernel(%arg0: i32, %arg1: i32, %arg2: memref<1x8x32xf32, #tpu.memory_space<vmem>>, %arg3: memref<1x32xf32, #tpu.memory_space<vmem>>, %arg4: memref<32x64xbf16, #tpu.memory_space<vmem>>, %arg5: memref<1x64xf32, #tpu.memory_space<vmem>>, %arg6: memref<8x64xf32, #tpu.memory_space<vmem>>, %arg7: memref<8x64xf32, #tpu.memory_space<vmem>>, %arg8: memref<1x8x64xbf16, #tpu.memory_space<vmem>>) attributes {dimension_semantics = [#tpu.dimension_semantics<parallel>, #tpu.dimension_semantics<parallel>], iteration_bounds = array<i64: 2, 1>, scalar_prefetch = 0 : i64, scratch_operands = 0 : i64, tpu.core_type = #tpu.core_type<tc>, window_params = [{transform_indices = @transform_0, window_bounds = array<i64: 1, 8, 32>}, {pipeline_mode = #tpu.pipeline_mode<synchronous>, transform_indices = @transform_1, window_bounds = array<i64: 1, 32>}, {pipeline_mode = #tpu.pipeline_mode<synchronous>, transform_indices = @transform_2, window_bounds = array<i64: 32, 64>}, {pipeline_mode = #tpu.pipeline_mode<synchronous>, transform_indices = @transform_3, window_bounds = array<i64: 1, 64>}, {transform_indices = @transform_4, window_bounds = array<i64: 8, 64>}, {transform_indices = @transform_5, window_bounds = array<i64: 8, 64>}, {transform_indices = @transform_6, window_bounds = array<i64: 1, 8, 64>}]} {
    %c0 = arith.constant 0 : index
    %c0_0 = arith.constant 0 : index
    %c0_1 = arith.constant 0 : index
    %0 = vector.load %arg2[%c0, %c0_0, %c0_1] : memref<1x8x32xf32, #tpu.memory_space<vmem>>, vector<1x8x32xf32>
    %1 = vector.shape_cast %0 : vector<1x8x32xf32> to vector<8x32xf32>
    %2 = arith.mulf %1, %1 : vector<8x32xf32>
    %cst = arith.constant dense<0.000000e+00> : vector<8xf32>
    %3 = vector.multi_reduction <add>, %2, %cst [1] : vector<8x32xf32> to vector<8xf32>
    %4 = vector.shape_cast %3 : vector<8xf32> to vector<8x1xf32>
    %cst_2 = arith.constant 3.200000e+01 : f32
    %5 = vector.broadcast %cst_2 : f32 to vector<8x1xf32>
    %6 = arith.divf %4, %5 : vector<8x1xf32>
    %cst_3 = arith.constant 9.99999997E-7 : f32
    %7 = vector.broadcast %cst_3 : f32 to vector<8x1xf32>
    %8 = arith.addf %6, %7 : vector<8x1xf32>
    %9 = math.rsqrt %8 : vector<8x1xf32>
    %10 = vector.broadcast %9 : vector<8x1xf32> to vector<8x32xf32>
    %11 = arith.mulf %1, %10 : vector<8x32xf32>
    %c0_4 = arith.constant 0 : index
    %c0_5 = arith.constant 0 : index
    %12 = vector.load %arg3[%c0_4, %c0_5] : memref<1x32xf32, #tpu.memory_space<vmem>>, vector<1x32xf32>
    %13 = vector.broadcast %12 : vector<1x32xf32> to vector<8x32xf32>
    %14 = arith.mulf %11, %13 : vector<8x32xf32>
    %15 = arith.truncf %14 : vector<8x32xf32> to vector<8x32xbf16>
    %c0_6 = arith.constant 0 : index
    %c0_7 = arith.constant 0 : index
    %16 = vector.load %arg4[%c0_6, %c0_7] : memref<32x64xbf16, #tpu.memory_space<vmem>>, vector<32x64xbf16>
    %cst_8 = arith.constant dense<0.000000e+00> : vector<8x64xf32>
    %17 = tpu.matmul %15, %16, %cst_8 {dimension_numbers = #tpu.dot_dimension_numbers<[1], [0], [0], [1], [0, 0, 1, 1], [], []>} : vector<8x32xbf16>, vector<32x64xbf16>, vector<8x64xf32> -> vector<8x64xf32>
    %c0_9 = arith.constant 0 : index
    %c0_10 = arith.constant 0 : index
    %18 = vector.load %arg5[%c0_9, %c0_10] : memref<1x64xf32, #tpu.memory_space<vmem>>, vector<1x64xf32>
    %19 = vector.broadcast %18 : vector<1x64xf32> to vector<8x64xf32>
    %20 = arith.addf %17, %19 : vector<8x64xf32>
    %21 = vector.extract_strided_slice %20 {offsets = [0, 60], sizes = [8, 4], strides = [1, 1]} : vector<8x64xf32> to vector<8x4xf32>
    %22 = vector.extract_strided_slice %20 {offsets = [0, 0], sizes = [8, 60], strides = [1, 1]} : vector<8x64xf32> to vector<8x60xf32>
    %23 = tpu.concatenate %21, %22 in 1 : vector<8x4xf32>, vector<8x60xf32> -> vector<8x64xf32>
    %24 = vector.extract_strided_slice %20 {offsets = [0, 4], sizes = [8, 60], strides = [1, 1]} : vector<8x64xf32> to vector<8x60xf32>
    %25 = vector.extract_strided_slice %20 {offsets = [0, 0], sizes = [8, 4], strides = [1, 1]} : vector<8x64xf32> to vector<8x4xf32>
    %26 = tpu.concatenate %24, %25 in 1 : vector<8x60xf32>, vector<8x4xf32> -> vector<8x64xf32>
    %27 = tpu.iota {dimensions = array<i32: 1>} : vector<8x64xi32>
    %c8_i32 = arith.constant 8 : i32
    %c0_i32 = arith.constant 0 : i32
    %28 = arith.cmpi eq, %c8_i32, %c0_i32 : i32
    %c1_i32 = arith.constant 1 : i32
    %29 = arith.select %28, %c1_i32, %c8_i32 : i32
    %30 = vector.broadcast %29 : i32 to vector<8x64xi32>
    %31 = arith.remsi %27, %30 : vector<8x64xi32>
    %c0_i32_11 = arith.constant 0 : i32
    %32 = vector.broadcast %c0_i32_11 : i32 to vector<8x64xi32>
    %33 = arith.cmpi ne, %31, %32 : vector<8x64xi32>
    %c0_i32_12 = arith.constant 0 : i32
    %34 = vector.broadcast %c0_i32_12 : i32 to vector<8x64xi32>
    %35 = arith.cmpi slt, %31, %34 : vector<8x64xi32>
    %c0_i32_13 = arith.constant 0 : i32
    %36 = arith.cmpi slt, %29, %c0_i32_13 : i32
    %37 = vector.broadcast %36 : i1 to vector<8x64xi1>
    %38 = vector.broadcast %37 : vector<8x64xi1> to vector<8x64xi1>
    %39 = arith.xori %35, %38 : vector<8x64xi1>
    %40 = arith.andi %39, %33 : vector<8x64xi1>
    %41 = vector.broadcast %29 : i32 to vector<8x64xi32>
    %42 = arith.addi %31, %41 : vector<8x64xi32>
    %43 = arith.select %40, %42, %31 : vector<8x64xi1>, vector<8x64xi32>
    %c4_i32 = arith.constant 4 : i32
    %44 = vector.broadcast %c4_i32 : i32 to vector<8x64xi32>
    %45 = arith.cmpi slt, %43, %44 : vector<8x64xi32>
    %46 = arith.select %45, %26, %23 : vector<8x64xi1>, vector<8x64xf32>
    %c0_14 = arith.constant 0 : index
    %c0_15 = arith.constant 0 : index
    %47 = vector.load %arg6[%c0_14, %c0_15] : memref<8x64xf32, #tpu.memory_space<vmem>>, vector<8x64xf32>
    %48 = arith.mulf %20, %47 : vector<8x64xf32>
    %c0_16 = arith.constant 0 : index
    %c0_17 = arith.constant 0 : index
    %49 = vector.load %arg7[%c0_16, %c0_17] : memref<8x64xf32, #tpu.memory_space<vmem>>, vector<8x64xf32>
    %50 = arith.mulf %46, %49 : vector<8x64xf32>
    %51 = arith.addf %48, %50 : vector<8x64xf32>
    %52 = arith.truncf %51 : vector<8x64xf32> to vector<8x64xbf16>
    %c0_18 = arith.constant 0 : index
    %c0_19 = arith.constant 0 : index
    %c0_20 = arith.constant 0 : index
    %53 = vector.load %arg8[%c0_18, %c0_19, %c0_20] : memref<1x8x64xbf16, #tpu.memory_space<vmem>>, vector<1x8x64xbf16>
    %54 = vector.shape_cast %53 : vector<1x8x64xbf16> to vector<8x64xbf16>
    %55 = vector.shape_cast %52 : vector<8x64xbf16> to vector<1x8x64xbf16>
    tpu.vector_store %arg8[%c0_18, %c0_19, %c0_20], %55 {strides = array<i32>} : memref<1x8x64xbf16, #tpu.memory_space<vmem>>, vector<1x8x64xbf16>,
    return
  }
  func.func @transform_0(%arg0: i32, %arg1: i32) -> (i32, i32, i32) {
    %c0_i32 = arith.constant 0 : i32
    %c0_i32_0 = arith.constant 0 : i32
    return %arg0, %arg1, %c0_i32 : i32, i32, i32
  }
  func.func @transform_1(%arg0: i32, %arg1: i32) -> (i32, i32) {
    %c0_i32 = arith.constant 0 : i32
    %c0_i32_0 = arith.constant 0 : i32
    %c0_i32_1 = arith.constant 0 : i32
    return %c0_i32, %c0_i32_0 : i32, i32
  }
  func.func @transform_2(%arg0: i32, %arg1: i32) -> (i32, i32) {
    %c0_i32 = arith.constant 0 : i32
    %c0_i32_0 = arith.constant 0 : i32
    %c0_i32_1 = arith.constant 0 : i32
    return %c0_i32, %c0_i32_0 : i32, i32
  }
  func.func @transform_3(%arg0: i32, %arg1: i32) -> (i32, i32) {
    %c0_i32 = arith.constant 0 : i32
    %c0_i32_0 = arith.constant 0 : i32
    %c0_i32_1 = arith.constant 0 : i32
    return %c0_i32, %c0_i32_0 : i32, i32
  }
  func.func @transform_4(%arg0: i32, %arg1: i32) -> (i32, i32) {
    %c0_i32 = arith.constant 0 : i32
    %c0_i32_0 = arith.constant 0 : i32
    return %arg1, %c0_i32 : i32, i32
  }
  func.func @transform_5(%arg0: i32, %arg1: i32) -> (i32, i32) {
    %c0_i32 = arith.constant 0 : i32
    %c0_i32_0 = arith.constant 0 : i32
    return %arg1, %c0_i32 : i32, i32
  }
  func.func @transform_6(%arg0: i32, %arg1: i32) -> (i32, i32, i32) {
    %c0_i32 = arith.constant 0 : i32
    %c0_i32_0 = arith.constant 0 : i32
    return %arg0, %arg1, %c0_i32 : i32, i32, i32
  }
}

</mosaic_0001>

<llo_original>
// kernel: qwen2_decoder_layer.4
$region0: #{qwen2_decoder_layer.4}
  #allocation0 [shape = 'u32[]', space=smem, size = 0x4, offset = 0x4, fixed_abs, tag = 'smem constant byte address 0x4 - core index']
  #allocation1 [shape = 'u32[144,128]{1,0:T(1,128)}', space=vmem, size = 0x12000, scoped, tag = 'internal scratch']
  %s0 = inlined_call_operand.vmem [shape: bf16[2,8,64], index: 0, kind: input, shape index: {}]
  %s1 = inlined_call_operand.vmem [shape: f32[8,8], index: 1, kind: input, shape index: {}]
  %s2 = inlined_call_operand.vmem [shape: bf16[2,8,32], index: 2, kind: output, shape index: {}]
  %s3 = sld [smem:[#allocation0]]
  $region41: #{qwen2_decoder_layer.4} parent=0
    _
  %s5 = ssub.s32 1, %s3
  %s6 = scalar_select 0, %s5, %s3
  loop: start=0, step=1, limit=4
  $region2: #{qwen2_decoder_layer.4} parent=0 // loop_pre_header
    _
  $region3: #{qwen2_decoder_layer.4} parent=0 // loop_header
    %s8 = sphi 0, %s12
    %p9 = scmp.ge.s32.totalorder %s8, 4
    %s18 = sphi 0, %s20
    %s21 = sphi 0, %s18
    %s22 = sphi 0, %s21
    %s38 = sphi 0, %s22
    %s42 = sphi 0, %s42
    %s44 = sphi 0, %s42
    %s45 = sphi 0, %s44
    %s59 = sphi 0, %s45
    %s65 = sphi 0, %s67
    %s68 = sphi 0, %s65
    %s69 = sphi 0, %s68
    %s85 = sphi 0, %s69
  $region4: #{qwen2_decoder_layer.4} parent=0 // loop_header_branch
    %11 = sbr.rel (%p9) target = $region8
  $region5: #{qwen2_decoder_layer.4} parent=0 // loop_body
    %s13 = ssub.s32 %s8, 1
    %s14 = ssub.s32 %s8, 2
    %s15 = sadd.s32 %s8, 1
    %s16 = ssub.s32 %s8, %s15
    %p17 = scmp.eq.s32.totalorder %s16, 0
    %s19 = sadd.s32 %s18, 1
    %s20 = scalar_select %p17, %s18, %s19
    %p23 = pneg %p17
    %p24 = scmp.eq.s32.totalorder %s8, 1
    %p25 = por %p23, %p24
    %p26 = scmp.ne.s32.totalorder %s18, %s21
    %p27 = scmp.eq.s32.totalorder %s8, 0
    %p28 = por %p26, %p27
    %p29 = scmp.ne.s32.totalorder %s18, %s21
    %p30 = scmp.eq.s32.totalorder %s13, 1
    %p31 = por %p29, %p30
    %p32 = scmp.ne.s32.totalorder %s21, %s22
    %p33 = scmp.eq.s32.totalorder %s13, 0
    %p34 = por %p32, %p33
    %p35 = scmp.ne.s32.totalorder %s21, %s22
    %p36 = scmp.eq.s32.totalorder %s14, 1
    %p37 = por %p35, %p36
    %p39 = scmp.ne.s32.totalorder %s22, %s38
    %p40 = scmp.eq.s32.totalorder %s14, 0
    %p41 = por %p39, %p40
    %s43 = sadd.s32 %s42, 1
    %p46 = scmp.eq.s32.totalorder %s8, 1
    %p47 = scmp.ne.s32.totalorder %s42, %s44
    %p48 = scmp.eq.s32.totalorder %s8, 0
    %p49 = por %p47, %p48
    %p50 = scmp.ne.s32.totalorder %s42, %s44
    %p51 = scmp.eq.s32.totalorder %s13, 1
    %p52 = por %p50, %p51
    %p53 = scmp.ne.s32.totalorder %s44, %s45
    %p54 = scmp.eq.s32.totalorder %s13, 0
    %p55 = por %p53, %p54
    %p56 = scmp.ne.s32.totalorder %s44, %s45
    %p57 = scmp.eq.s32.totalorder %s14, 1
    %p58 = por %p56, %p57
    %p60 = scmp.ne.s32.totalorder %s45, %s59
    %p61 = scmp.eq.s32.totalorder %s14, 0
    %p62 = por %p60, %p61
    %s63 = ssub.s32 %s8, %s15
    %p64 = scmp.eq.s32.totalorder %s63, 0
    %s66 = sadd.s32 %s65, 1
    %s67 = scalar_select %p64, %s65, %s66
    %p70 = pneg %p64
    %p71 = scmp.eq.s32.totalorder %s8, 1
    %p72 = por %p70, %p71
    %p73 = scmp.ne.s32.totalorder %s65, %s68
    %p74 = scmp.eq.s32.totalorder %s8, 0
    %p75 = por %p73, %p74
    %p76 = scmp.ne.s32.totalorder %s65, %s68
    %p77 = scmp.eq.s32.totalorder %s13, 1
    %p78 = por %p76, %p77
    %p79 = scmp.ne.s32.totalorder %s68, %s69
    %p80 = scmp.eq.s32.totalorder %s13, 0
    %p81 = por %p79, %p80
    %p82 = scmp.ne.s32.totalorder %s68, %s69
    %p83 = scmp.eq.s32.totalorder %s14, 1
    %p84 = por %p82, %p83
    %p86 = scmp.ne.s32.totalorder %s69, %s85
    %p87 = scmp.eq.s32.totalorder %s14, 0
    %p88 = por %p86, %p87
    %p89 = scmp.le.s32.totalorder 1, %s8
    %p90 = scmp.lt.s32.totalorder %s8, 3
    %p91 = pnand %p89, %p90
    %p92 = pneg %p91
    // Predicated region
    $region9: #{qwen2_decoder_layer.4} parent=5 // pred_check
      _
    $region10: #{qwen2_decoder_layer.4} parent=5 // pred_check_branch
      %94 = sbr.rel (%p91) target = $region12
    $region11: #{qwen2_decoder_layer.4} parent=5 // pred_region
      %s95 = ssub.s32 %s8, 1
      // Predicated region
      $region13: #{qwen2_decoder_layer.4} parent=11 // pred_check
        %p96 = pneg %p55
      $region14: #{qwen2_decoder_layer.4} parent=11 // pred_check_branch
        %98 = sbr.rel (%p96) target = $region16
      $region15: #{qwen2_decoder_layer.4} parent=11 // pred_region
        _
      $region16: #{qwen2_decoder_layer.4} parent=11 // pred_fallthru
        _
    $region12: #{qwen2_decoder_layer.4} parent=5 // pred_fallthru
      _
    %p99 = scmp.lt.s32.totalorder %s8, 2
    // Predicated region
    $region17: #{qwen2_decoder_layer.4} parent=5 // pred_check
      %p100 = pneg %p99
    $region18: #{qwen2_decoder_layer.4} parent=5 // pred_check_branch
      %102 = sbr.rel (%p100) target = $region20
    $region19: #{qwen2_decoder_layer.4} parent=5 // pred_region
      // Predicated region
      $region21: #{qwen2_decoder_layer.4} parent=19 // pred_check
        %p103 = pneg %p28
      $region22: #{qwen2_decoder_layer.4} parent=19 // pred_check_branch
        %105 = sbr.rel (%p103) target = $region24
      $region23: #{qwen2_decoder_layer.4} parent=19 // pred_region
        %p106 = scmp.lt.s32.totalorder %s8, 1
        %s107 = scalar_select %p106, %s8, 1
        %s108 = smul.addr %s107, 4
        %s109 = scalar_lea.vmem %s0, %s108
      $region24: #{qwen2_decoder_layer.4} parent=19 // pred_fallthru
        _
    $region20: #{qwen2_decoder_layer.4} parent=5 // pred_fallthru
      _
    %p110 = scmp.le.s32.totalorder 1, %s8
    %p111 = scmp.lt.s32.totalorder %s8, 3
    %p112 = pnand %p110, %p111
    %p113 = pneg %p112
    // Predicated region
    $region25: #{qwen2_decoder_layer.4} parent=5 // pred_check
      _
    $region26: #{qwen2_decoder_layer.4} parent=5 // pred_check_branch
      %115 = sbr.rel (%p112) target = $region28
    $region27: #{qwen2_decoder_layer.4} parent=5 // pred_region
      %s116 = ssub.s32 %s8, 1
      %p117 = scmp.lt.s32.totalorder %s13, 1
      %s118 = scalar_select %p117, %s13, 1
      %s119 = smul.addr %s118, 4
      %s120 = scalar_lea.vmem %s0, %s119
      %p121 = pneg %p34
      %p122 = pneg %p31
      %p123 = pneg %p55
      %p124 = pneg %p52
      %p125 = pneg %p81
      %p126 = pneg %p78
      %p127 = scmp.lt.s32.totalorder %s13, 1
      %s128 = scalar_select %p127, %s13, 1
      %s129 = smul.addr %s128, 4
      %s130 = scalar_lea.vmem %s2, %s129
      %p131 = scmp.lt.s32.totalorder %s13, 1
      %s132 = scalar_select %p131, %s13, 1
      %s133 = smul.addr %s132, 4
      %s134 = scalar_lea.vmem %s0, %s133
      %p135 = scmp.lt.s32.totalorder %s13, 1
      %s136 = scalar_select %p135, %s13, 1
      %s137 = smul.addr %s136, 4
      %s138 = scalar_lea.vmem %s2, %s137
      %v140 = vld [vmem:[%s134] sm:$0xf]
      %v141 = vld [vmem:[%s1] sm:$0xff]
      %v143 = vunpack.c.l.b16 %v140
      %v144 = vpack.c.b16 %v143, %v143
      %145 = vrot.lane.b32.xlu0 %v144, 96
      %v146 = vpop.permute.xlu0 %145
      %vm147 = vcmask 64512
      %v149 = vsel %vm147, %v140, 0
      %v152 = vsel %vm147, %v146, 0
      %154 = vmatprep.subr.bf16.mxu0 0
      %155 = vmatpush1.bf16.xpose.msra.mxu0 0
      %156 = vmatprep.subr.bf16.mxu0 0
      %157 = vmatpush1.bf16.xpose.msra.mxu0 0
      %158 = vmatprep.subr.bf16.mxu0 0
      %159 = vmatpush1.bf16.xpose.msra.mxu0 0
      %160 = vmatprep.subr.bf16.mxu0 0
      %161 = vmatpush1.bf16.xpose.msra.mxu0 0
      %162 = vmatprep.subr.bf16.mxu0 0
      %163 = vmatpush1.bf16.xpose.msra.mxu0 0
      %164 = vmatprep.subr.bf16.mxu0 0
      %165 = vmatpush1.bf16.xpose.msra.mxu0 0
      %166 = vmatprep.subr.bf16.mxu0 0
      %167 = vmatpush1.bf16.xpose.msra.mxu0 0
      %168 = vmatprep.subr.bf16.mxu0 0
      %169 = vmatpush1.bf16.xpose.msra.mxu0 %v152
      %170 = vmatprep.subr.bf16.mxu0 0
      %171 = vmatpush2.bf16.xpose.msra.mxu0 0
      %172 = vmatprep.subr.bf16.mxu0 0
      %173 = vmatpush2.bf16.xpose.msra.mxu0 0
      %174 = vmatprep.subr.bf16.mxu0 0
      %175 = vmatpush2.bf16.xpose.msra.mxu0 0
      %176 = vmatprep.subr.bf16.mxu0 0
      %177 = vmatpush2.bf16.xpose.msra.mxu0 0
      %178 = vmatprep.subr.bf16.mxu0 0
      %179 = vmatpush2.bf16.xpose.msra.mxu0 0
      %180 = vmatprep.subr.bf16.mxu0 0
      %181 = vmatpush2.bf16.xpose.msra.mxu0 0
      %182 = vmatprep.subr.bf16.mxu0 0
      %183 = vmatpush2.bf16.xpose.msra.mxu0 0
      %184 = vmatprep.subr.bf16.mxu0 0
      %185 = vmatpush2.bf16.xpose.msra.mxu0 0
      %186 = vmatprep.mubr.bf16.mxu0 0
      %187 = vmatmul.mubr.bf16.gmra.mxu0 %v149
      %v188 = vpop.f32.mrf.mxu0
      %v189 = vadd.f32 %v141, %v188
      %v190 = vpop.f32.mrf.mxu0
      %v191 = vpop.f32.mrf.mxu0
      %v192 = vpop.f32.mrf.mxu0
      %193 = vdwg.mxu0
      %v194 = vsel %vm147, %v189, -inf
      %195 = vmax.xlane.f32.xlu0 %v194
      %v196 = vpop.xlane.xlu0 %195
      %v197 = vsub.f32 %v189, %v196
      %v198 = vmul.f32 %v197, 1.442695
      %v199 = vpow.pop %v198
      %v200 = vsel %vm147, %v199, 0.0
      %201 = vadd.xlane.f32.xlu0 %v200
      %v202 = vpop.xlane.xlu0 %201
      %v203 = vrcp.pop %v202
      %v204 = vmul.f32 %v199, %v203
      %v205 = vpack.c.bf16 %v204, %v204
      %206 = vrot.lane.b32.xlu0 %v144, 80
      %v207 = vpop.permute.xlu0 %206
      %v209 = vsel %vm147, %v205, 0
      %vm211 = vcmask 1043456
      %v213 = vsel %vm211, %v207, 0
      %215 = vmatprep.subr.bf16.mxu0 0
      %216 = vmatpush1.bf16.msra.mxu0 0
      %217 = vmatprep.subr.bf16.mxu0 0
      %218 = vmatpush1.bf16.msra.mxu0 0
      %219 = vmatprep.subr.bf16.mxu0 0
      %220 = vmatpush1.bf16.msra.mxu0 0
      %221 = vmatprep.subr.bf16.mxu0 0
      %222 = vmatpush1.bf16.msra.mxu0 0
      %223 = vmatprep.subr.bf16.mxu0 0
      %224 = vmatpush1.bf16.msra.mxu0 0
      %225 = vmatprep.subr.bf16.mxu0 0
      %226 = vmatpush1.bf16.msra.mxu0 0
      %227 = vmatprep.subr.bf16.mxu0 0
      %228 = vmatpush1.bf16.msra.mxu0 0
      %229 = vmatprep.subr.bf16.mxu0 0
      %230 = vmatpush1.bf16.msra.mxu0 %v213
      %231 = vmatprep.subr.bf16.mxu0 0
      %232 = vmatpush2.bf16.msra.mxu0 0
      %233 = vmatprep.subr.bf16.mxu0 0
      %234 = vmatpush2.bf16.msra.mxu0 0
      %235 = vmatprep.subr.bf16.mxu0 0
      %236 = vmatpush2.bf16.msra.mxu0 0
      %237 = vmatprep.subr.bf16.mxu0 0
      %238 = vmatpush2.bf16.msra.mxu0 0
      %239 = vmatprep.subr.bf16.mxu0 0
      %240 = vmatpush2.bf16.msra.mxu0 0
      %241 = vmatprep.subr.bf16.mxu0 0
      %242 = vmatpush2.bf16.msra.mxu0 0
      %243 = vmatprep.subr.bf16.mxu0 0
      %244 = vmatpush2.bf16.msra.mxu0 0
      %245 = vmatprep.subr.bf16.mxu0 0
      %246 = vmatpush2.bf16.msra.mxu0 0
      %247 = vmatprep.mubr.bf16.mxu0 0
      %248 = vmatmul.mubr.bf16.gmra.mxu0 %v209
      %v249 = vpop.f32.mrf.mxu0
      %v250 = vadd.f32 0.0, %v249
      %v251 = vpop.f32.mrf.mxu0
      %v252 = vpop.f32.mrf.mxu0
      %v253 = vpop.f32.mrf.mxu0
      %254 = vdwg.mxu0
      %255 = vrot.lane.b32.xlu0 %v144, 120
      %v256 = vpop.permute.xlu0 %255
      %v258 = vsel %vm147, %v256, 0
      %260 = vmatprep.subr.bf16.mxu0 0
      %261 = vmatpush1.bf16.xpose.msra.mxu0 0
      %262 = vmatprep.subr.bf16.mxu0 0
      %263 = vmatpush1.bf16.xpose.msra.mxu0 0
      %264 = vmatprep.subr.bf16.mxu0 0
      %265 = vmatpush1.bf16.xpose.msra.mxu0 0
      %266 = vmatprep.subr.bf16.mxu0 0
      %267 = vmatpush1.bf16.xpose.msra.mxu0 0
      %268 = vmatprep.subr.bf16.mxu0 0
      %269 = vmatpush1.bf16.xpose.msra.mxu0 0
      %270 = vmatprep.subr.bf16.mxu0 0
      %271 = vmatpush1.bf16.xpose.msra.mxu0 0
      %272 = vmatprep.subr.bf16.mxu0 0
      %273 = vmatpush1.bf16.xpose.msra.mxu0 0
      %274 = vmatprep.subr.bf16.mxu0 0
      %275 = vmatpush1.bf16.xpose.msra.mxu0 %v152
      %276 = vmatprep.subr.bf16.mxu0 0
      %277 = vmatpush2.bf16.xpose.msra.mxu0 0
      %278 = vmatprep.subr.bf16.mxu0 0
      %279 = vmatpush2.bf16.xpose.msra.mxu0 0
      %280 = vmatprep.subr.bf16.mxu0 0
      %281 = vmatpush2.bf16.xpose.msra.mxu0 0
      %282 = vmatprep.subr.bf16.mxu0 0
      %283 = vmatpush2.bf16.xpose.msra.mxu0 0
      %284 = vmatprep.subr.bf16.mxu0 0
      %285 = vmatpush2.bf16.xpose.msra.mxu0 0
      %286 = vmatprep.subr.bf16.mxu0 0
      %287 = vmatpush2.bf16.xpose.msra.mxu0 0
      %288 = vmatprep.subr.bf16.mxu0 0
      %289 = vmatpush2.bf16.xpose.msra.mxu0 0
      %290 = vmatprep.subr.bf16.mxu0 0
      %291 = vmatpush2.bf16.xpose.msra.mxu0 0
      %292 = vmatprep.mubr.bf16.mxu0 0
      %293 = vmatmul.mubr.bf16.gmra.mxu0 %v258
      %v294 = vpop.f32.mrf.mxu0
      %v295 = vadd.f32 %v141, %v294
      %v296 = vpop.f32.mrf.mxu0
      %v297 = vpop.f32.mrf.mxu0
      %v298 = vpop.f32.mrf.mxu0
      %299 = vdwg.mxu0
      %v300 = vsel %vm147, %v295, -inf
      %301 = vmax.xlane.f32.xlu0 %v300
      %v302 = vpop.xlane.xlu0 %301
      %v303 = vsub.f32 %v295, %v302
      %v304 = vmul.f32 %v303, 1.442695
      %v305 = vpow.pop %v304
      %v306 = vsel %vm147, %v305, 0.0
      %307 = vadd.xlane.f32.xlu0 %v306
      %v308 = vpop.xlane.xlu0 %307
      %v309 = vrcp.pop %v308
      %v310 = vmul.f32 %v305, %v309
      %v311 = vpack.c.bf16 %v310, %v310
      %v313 = vsel %vm147, %v311, 0
      %315 = vmatprep.subr.bf16.mxu0 0
      %316 = vmatpush1.bf16.msra.mxu0 0
      %317 = vmatprep.subr.bf16.mxu0 0
      %318 = vmatpush1.bf16.msra.mxu0 0
      %319 = vmatprep.subr.bf16.mxu0 0
      %320 = vmatpush1.bf16.msra.mxu0 0
      %321 = vmatprep.subr.bf16.mxu0 0
      %322 = vmatpush1.bf16.msra.mxu0 0
      %323 = vmatprep.subr.bf16.mxu0 0
      %324 = vmatpush1.bf16.msra.mxu0 0
      %325 = vmatprep.subr.bf16.mxu0 0
      %326 = vmatpush1.bf16.msra.mxu0 0
      %327 = vmatprep.subr.bf16.mxu0 0
      %328 = vmatpush1.bf16.msra.mxu0 0
      %329 = vmatprep.subr.bf16.mxu0 0
      %330 = vmatpush1.bf16.msra.mxu0 %v213
      %331 = vmatprep.subr.bf16.mxu0 0
      %332 = vmatpush2.bf16.msra.mxu0 0
      %333 = vmatprep.subr.bf16.mxu0 0
      %334 = vmatpush2.bf16.msra.mxu0 0
      %335 = vmatprep.subr.bf16.mxu0 0
      %336 = vmatpush2.bf16.msra.mxu0 0
      %337 = vmatprep.subr.bf16.mxu0 0
      %338 = vmatpush2.bf16.msra.mxu0 0
      %339 = vmatprep.subr.bf16.mxu0 0
      %340 = vmatpush2.bf16.msra.mxu0 0
      %341 = vmatprep.subr.bf16.mxu0 0
      %342 = vmatpush2.bf16.msra.mxu0 0
      %343 = vmatprep.subr.bf16.mxu0 0
      %344 = vmatpush2.bf16.msra.mxu0 0
      %345 = vmatprep.subr.bf16.mxu0 0
      %346 = vmatpush2.bf16.msra.mxu0 0
      %347 = vmatprep.mubr.bf16.mxu0 0
      %348 = vmatmul.mubr.bf16.gmra.mxu0 %v313
      %v349 = vpop.f32.mrf.mxu0
      %v350 = vadd.f32 0.0, %v349
      %v351 = vpop.f32.mrf.mxu0
      %v352 = vpop.f32.mrf.mxu0
      %v353 = vpop.f32.mrf.mxu0
      %354 = vdwg.mxu0
      %355 = vrot.lane.b32.xlu0 %v144, 112
      %v356 = vpop.permute.xlu0 %355
      %357 = vrot.lane.b32.xlu0 %v144, 88
      %v358 = vpop.permute.xlu0 %357
      %v360 = vsel %vm147, %v356, 0
      %v363 = vsel %vm147, %v358, 0
      %365 = vmatprep.subr.bf16.mxu0 0
      %366 = vmatpush1.bf16.xpose.msra.mxu0 0
      %367 = vmatprep.subr.bf16.mxu0 0
      %368 = vmatpush1.bf16.xpose.msra.mxu0 0
      %369 = vmatprep.subr.bf16.mxu0 0
      %370 = vmatpush1.bf16.xpose.msra.mxu0 0
      %371 = vmatprep.subr.bf16.mxu0 0
      %372 = vmatpush1.bf16.xpose.msra.mxu0 0
      %373 = vmatprep.subr.bf16.mxu0 0
      %374 = vmatpush1.bf16.xpose.msra.mxu0 0
      %375 = vmatprep.subr.bf16.mxu0 0
      %376 = vmatpush1.bf16.xpose.msra.mxu0 0
      %377 = vmatprep.subr.bf16.mxu0 0
      %378 = vmatpush1.bf16.xpose.msra.mxu0 0
      %379 = vmatprep.subr.bf16.mxu0 0
      %380 = vmatpush1.bf16.xpose.msra.mxu0 %v363
      %381 = vmatprep.subr.bf16.mxu0 0
      %382 = vmatpush2.bf16.xpose.msra.mxu0 0
      %383 = vmatprep.subr.bf16.mxu0 0
      %384 = vmatpush2.bf16.xpose.msra.mxu0 0
      %385 = vmatprep.subr.bf16.mxu0 0
      %386 = vmatpush2.bf16.xpose.msra.mxu0 0
      %387 = vmatprep.subr.bf16.mxu0 0
      %388 = vmatpush2.bf16.xpose.msra.mxu0 0
      %389 = vmatprep.subr.bf16.mxu0 0
      %390 = vmatpush2.bf16.xpose.msra.mxu0 0
      %391 = vmatprep.subr.bf16.mxu0 0
      %392 = vmatpush2.bf16.xpose.msra.mxu0 0
      %393 = vmatprep.subr.bf16.mxu0 0
      %394 = vmatpush2.bf16.xpose.msra.mxu0 0
      %395 = vmatprep.subr.bf16.mxu0 0
      %396 = vmatpush2.bf16.xpose.msra.mxu0 0
      %397 = vmatprep.mubr.bf16.mxu0 0
      %398 = vmatmul.mubr.bf16.gmra.mxu0 %v360
      %v399 = vpop.f32.mrf.mxu0
      %v400 = vadd.f32 %v141, %v399
      %v401 = vpop.f32.mrf.mxu0
      %v402 = vpop.f32.mrf.mxu0
      %v403 = vpop.f32.mrf.mxu0
      %404 = vdwg.mxu0
      %v405 = vsel %vm147, %v400, -inf
      %406 = vmax.xlane.f32.xlu0 %v405
      %v407 = vpop.xlane.xlu0 %406
      %v408 = vsub.f32 %v400, %v407
      %v409 = vmul.f32 %v408, 1.442695
      %v410 = vpow.pop %v409
      %v411 = vsel %vm147, %v410, 0.0
      %412 = vadd.xlane.f32.xlu0 %v411
      %v413 = vpop.xlane.xlu0 %412
      %v414 = vrcp.pop %v413
      %v415 = vmul.f32 %v410, %v414
      %v416 = vpack.c.bf16 %v415, %v415
      %417 = vrot.lane.b32.xlu0 %v144, 72
      %v418 = vpop.permute.xlu0 %417
      %v420 = vsel %vm147, %v416, 0
      %v423 = vsel %vm211, %v418, 0
      %425 = vmatprep.subr.bf16.mxu0 0
      %426 = vmatpush1.bf16.msra.mxu0 0
      %427 = vmatprep.subr.bf16.mxu0 0
      %428 = vmatpush1.bf16.msra.mxu0 0
      %429 = vmatprep.subr.bf16.mxu0 0
      %430 = vmatpush1.bf16.msra.mxu0 0
      %431 = vmatprep.subr.bf16.mxu0 0
      %432 = vmatpush1.bf16.msra.mxu0 0
      %433 = vmatprep.subr.bf16.mxu0 0
      %434 = vmatpush1.bf16.msra.mxu0 0
      %435 = vmatprep.subr.bf16.mxu0 0
      %436 = vmatpush1.bf16.msra.mxu0 0
      %437 = vmatprep.subr.bf16.mxu0 0
      %438 = vmatpush1.bf16.msra.mxu0 0
      %439 = vmatprep.subr.bf16.mxu0 0
      %440 = vmatpush1.bf16.msra.mxu0 %v423
      %441 = vmatprep.subr.bf16.mxu0 0
      %442 = vmatpush2.bf16.msra.mxu0 0
      %443 = vmatprep.subr.bf16.mxu0 0
      %444 = vmatpush2.bf16.msra.mxu0 0
      %445 = vmatprep.subr.bf16.mxu0 0
      %446 = vmatpush2.bf16.msra.mxu0 0
      %447 = vmatprep.subr.bf16.mxu0 0
      %448 = vmatpush2.bf16.msra.mxu0 0
      %449 = vmatprep.subr.bf16.mxu0 0
      %450 = vmatpush2.bf16.msra.mxu0 0
      %451 = vmatprep.subr.bf16.mxu0 0
      %452 = vmatpush2.bf16.msra.mxu0 0
      %453 = vmatprep.subr.bf16.mxu0 0
      %454 = vmatpush2.bf16.msra.mxu0 0
      %455 = vmatprep.subr.bf16.mxu0 0
      %456 = vmatpush2.bf16.msra.mxu0 0
      %457 = vmatprep.mubr.bf16.mxu0 0
      %458 = vmatmul.mubr.bf16.gmra.mxu0 %v420
      %v459 = vpop.f32.mrf.mxu0
      %v460 = vadd.f32 0.0, %v459
      %v461 = vpop.f32.mrf.mxu0
      %v462 = vpop.f32.mrf.mxu0
      %v463 = vpop.f32.mrf.mxu0
      %464 = vdwg.mxu0
      %465 = vrot.lane.b32.xlu0 %v144, 104
      %v466 = vpop.permute.xlu0 %465
      %v468 = vsel %vm147, %v466, 0
      %470 = vmatprep.subr.bf16.mxu0 0
      %471 = vmatpush1.bf16.xpose.msra.mxu0 0
      %472 = vmatprep.subr.bf16.mxu0 0
      %473 = vmatpush1.bf16.xpose.msra.mxu0 0
      %474 = vmatprep.subr.bf16.mxu0 0
      %475 = vmatpush1.bf16.xpose.msra.mxu0 0
      %476 = vmatprep.subr.bf16.mxu0 0
      %477 = vmatpush1.bf16.xpose.msra.mxu0 0
      %478 = vmatprep.subr.bf16.mxu0 0
      %479 = vmatpush1.bf16.xpose.msra.mxu0 0
      %480 = vmatprep.subr.bf16.mxu0 0
      %481 = vmatpush1.bf16.xpose.msra.mxu0 0
      %482 = vmatprep.subr.bf16.mxu0 0
      %483 = vmatpush1.bf16.xpose.msra.mxu0 0
      %484 = vmatprep.subr.bf16.mxu0 0
      %485 = vmatpush1.bf16.xpose.msra.mxu0 %v363
      %486 = vmatprep.subr.bf16.mxu0 0
      %487 = vmatpush2.bf16.xpose.msra.mxu0 0
      %488 = vmatprep.subr.bf16.mxu0 0
      %489 = vmatpush2.bf16.xpose.msra.mxu0 0
      %490 = vmatprep.subr.bf16.mxu0 0
      %491 = vmatpush2.bf16.xpose.msra.mxu0 0
      %492 = vmatprep.subr.bf16.mxu0 0
      %493 = vmatpush2.bf16.xpose.msra.mxu0 0
      %494 = vmatprep.subr.bf16.mxu0 0
      %495 = vmatpush2.bf16.xpose.msra.mxu0 0
      %496 = vmatprep.subr.bf16.mxu0 0
      %497 = vmatpush2.bf16.xpose.msra.mxu0 0
      %498 = vmatprep.subr.bf16.mxu0 0
      %499 = vmatpush2.bf16.xpose.msra.mxu0 0
      %500 = vmatprep.subr.bf16.mxu0 0
      %501 = vmatpush2.bf16.xpose.msra.mxu0 0
      %502 = vmatprep.mubr.bf16.mxu0 0
      %503 = vmatmul.mubr.bf16.gmra.mxu0 %v468
      %v504 = vpop.f32.mrf.mxu0
      %v505 = vadd.f32 %v141, %v504
      %v506 = vpop.f32.mrf.mxu0
      %v507 = vpop.f32.mrf.mxu0
      %v508 = vpop.f32.mrf.mxu0
      %509 = vdwg.mxu0
      %v510 = vsel %vm147, %v505, -inf
      %511 = vmax.xlane.f32.xlu0 %v510
      %v512 = vpop.xlane.xlu0 %511
      %v513 = vsub.f32 %v505, %v512
      %v514 = vmul.f32 %v513, 1.442695
      %v515 = vpow.pop %v514
      %v516 = vsel %vm147, %v515, 0.0
      %517 = vadd.xlane.f32.xlu0 %v516
      %v518 = vpop.xlane.xlu0 %517
      %v519 = vrcp.pop %v518
      %v520 = vmul.f32 %v515, %v519
      %v521 = vpack.c.bf16 %v520, %v520
      %v523 = vsel %vm147, %v521, 0
      %525 = vmatprep.subr.bf16.mxu0 0
      %526 = vmatpush1.bf16.msra.mxu0 0
      %527 = vmatprep.subr.bf16.mxu0 0
      %528 = vmatpush1.bf16.msra.mxu0 0
      %529 = vmatprep.subr.bf16.mxu0 0
      %530 = vmatpush1.bf16.msra.mxu0 0
      %531 = vmatprep.subr.bf16.mxu0 0
      %532 = vmatpush1.bf16.msra.mxu0 0
      %533 = vmatprep.subr.bf16.mxu0 0
      %534 = vmatpush1.bf16.msra.mxu0 0
      %535 = vmatprep.subr.bf16.mxu0 0
      %536 = vmatpush1.bf16.msra.mxu0 0
      %537 = vmatprep.subr.bf16.mxu0 0
      %538 = vmatpush1.bf16.msra.mxu0 0
      %539 = vmatprep.subr.bf16.mxu0 0
      %540 = vmatpush1.bf16.msra.mxu0 %v423
      %541 = vmatprep.subr.bf16.mxu0 0
      %542 = vmatpush2.bf16.msra.mxu0 0
      %543 = vmatprep.subr.bf16.mxu0 0
      %544 = vmatpush2.bf16.msra.mxu0 0
      %545 = vmatprep.subr.bf16.mxu0 0
      %546 = vmatpush2.bf16.msra.mxu0 0
      %547 = vmatprep.subr.bf16.mxu0 0
      %548 = vmatpush2.bf16.msra.mxu0 0
      %549 = vmatprep.subr.bf16.mxu0 0
      %550 = vmatpush2.bf16.msra.mxu0 0
      %551 = vmatprep.subr.bf16.mxu0 0
      %552 = vmatpush2.bf16.msra.mxu0 0
      %553 = vmatprep.subr.bf16.mxu0 0
      %554 = vmatpush2.bf16.msra.mxu0 0
      %555 = vmatprep.subr.bf16.mxu0 0
      %556 = vmatpush2.bf16.msra.mxu0 0
      %557 = vmatprep.mubr.bf16.mxu0 0
      %558 = vmatmul.mubr.bf16.gmra.mxu0 %v523
      %v559 = vpop.f32.mrf.mxu0
      %v560 = vadd.f32 0.0, %v559
      %v561 = vpop.f32.mrf.mxu0
      %v562 = vpop.f32.mrf.mxu0
      %v563 = vpop.f32.mrf.mxu0
      %564 = vdwg.mxu0
      %566 = vrot.lane.b32.xlu0 %v350, 8
      %v567 = vpop.permute.xlu0 %566
      %570 = vrot.lane.b32.xlu0 %v460, 16
      %v571 = vpop.permute.xlu0 %570
      %574 = vrot.lane.b32.xlu0 %v560, 24
      %v575 = vpop.permute.xlu0 %574
      %v577 = vsel %vm147, %v250, %v567
      %vm578 = vcmask 130048
      %v579 = vsel %vm578, %v577, %v571
      %vm580 = vcmask 195584
      %v581 = vsel %vm580, %v579, %v575
      %v582 = vpack.c.bf16 %v581, %v581
      %vm583 = vcmask 257024
      %584 = vst.msk [vmem:[%s138] sm:$0xf] %vm583, %v582
      %p585 = scmp.lt.s32.totalorder %s13, 1
      %s586 = scalar_select %p585, %s13, 1
      %s587 = smul.addr %s586, 4
      %s588 = scalar_lea.vmem %s2, %s587
      // Predicated region
      $region29: #{qwen2_decoder_layer.4} parent=27 // pred_check
        %p589 = pneg %p78
      $region30: #{qwen2_decoder_layer.4} parent=27 // pred_check_branch
        %591 = sbr.rel (%p589) target = $region32
      $region31: #{qwen2_decoder_layer.4} parent=27 // pred_region
        _
      $region32: #{qwen2_decoder_layer.4} parent=27 // pred_fallthru
        _
    $region28: #{qwen2_decoder_layer.4} parent=5 // pred_fallthru
      _
    %p592 = scmp.le.s32.totalorder 2, %s8
    // Predicated region
    $region33: #{qwen2_decoder_layer.4} parent=5 // pred_check
      %p593 = pneg %p592
    $region34: #{qwen2_decoder_layer.4} parent=5 // pred_check_branch
      %595 = sbr.rel (%p593) target = $region36
    $region35: #{qwen2_decoder_layer.4} parent=5 // pred_region
      %s596 = ssub.s32 %s8, 2
      // Predicated region
      $region37: #{qwen2_decoder_layer.4} parent=35 // pred_check
        %p597 = pneg %p84
      $region38: #{qwen2_decoder_layer.4} parent=35 // pred_check_branch
        %599 = sbr.rel (%p597) target = $region40
      $region39: #{qwen2_decoder_layer.4} parent=35 // pred_region
        %p600 = scmp.lt.s32.totalorder %s14, 1
        %s601 = scalar_select %p600, %s14, 1
        %s602 = smul.addr %s601, 4
        %s603 = scalar_lea.vmem %s2, %s602
      $region40: #{qwen2_decoder_layer.4} parent=35 // pred_fallthru
        _
    $region36: #{qwen2_decoder_layer.4} parent=5 // pred_fallthru
      _
  $region6: #{qwen2_decoder_layer.4} parent=0 // loop_footer
    %s12 = sadd.s32 1, %s8
  $region7: #{qwen2_decoder_layer.4} parent=0 // loop_footer_branch
    %7 = sbr.rel target = $region3
  $region8: #{qwen2_decoder_layer.4} parent=0 // loop_exit
    _

// kernel: qwen2_decoder_layer.3
$region0: #{qwen2_decoder_layer.3}
  #allocation0 [shape = 'u32[]', space=smem, size = 0x4, offset = 0x4, fixed_abs, tag = 'smem constant byte address 0x4 - core index']
  #allocation1 [shape = 'u32[144,128]{1,0:T(1,128)}', space=vmem, size = 0x12000, scoped, tag = 'internal scratch']
  %s0 = inlined_call_operand.vmem [shape: f32[2,8,32], index: 0, kind: input, shape index: {}]
  %s1 = inlined_call_operand.vmem [shape: f32[1,32], index: 1, kind: input, shape index: {}]
  %s2 = inlined_call_operand.hbm [shape: bf16[32,64], index: 2, kind: input, shape index: {}]
  %s3 = inlined_call_operand.hbm [shape: f32[1,64], index: 3, kind: input, shape index: {}]
  %s4 = inlined_call_operand.vmem [shape: f32[8,64], index: 4, kind: input, shape index: {}]
  %s5 = inlined_call_operand.hbm [shape: f32[8,64], index: 5, kind: input, shape index: {}]
  %s6 = inlined_call_operand.vmem [shape: bf16[2,8,64], index: 6, kind: output, shape index: {}]
  %s7 = sld [smem:[#allocation0]]
  $region69: #{qwen2_decoder_layer.3} parent=0
    _
  %s9 = ssub.s32 1, %s7
  %s10 = scalar_select 0, %s9, %s7
  $region1: #{qwen2_decoder_layer.3} parent=0
    #allocation2 [shape = 'u8[8192]{0}', space=vmem, size = 0x2000, scoped, tag = 'input window, operand 2, single buffered']
    #allocation3 [shape = 's32[2]{0}', space=sflag, size = 0x8, scoped, tag = 'scoped memory for qwen2_decoder_layer.3']
    #allocation4 [shape = 'u8[512]{0}', space=vmem, size = 0x400, scoped, tag = 'input window, operand 3, single buffered']
    #allocation5 [shape = 's32[1]{0}', space=sflag, size = 0x4, scoped, tag = 'scoped memory for qwen2_decoder_layer.3']
    #allocation6 [shape = 'u8[4096]{0}', space=vmem, size = 0x1000, scoped, tag = 'input window, operand 5, single buffered']
    %11 = vsyncpa [#allocation3], 0
    %12 = vsyncpa [#allocation5], 0
    loop: start=0, step=1, limit=4
    $region2: #{qwen2_decoder_layer.3} parent=1 // loop_pre_header
      _
    $region3: #{qwen2_decoder_layer.3} parent=1 // loop_header
      %s14 = sphi 0, %s18
      %p15 = scmp.ge.s32.totalorder %s14, 4
      %s21 = sphi 0, %s33
      %s22 = sphi 0, %s29
      %s23 = sphi 0, %s21
      %s24 = sphi 0, %s22
      %s25 = sphi 0, %s23
      %s26 = sphi 0, %s24
      %s38 = sphi 0, %s40
      %s41 = sphi 0, %s38
      %s42 = sphi 0, %s41
      %s58 = sphi 0, %s42
      %s62 = sphi 0, %s62
      %s64 = sphi 0, %s62
      %s65 = sphi 0, %s64
      %s79 = sphi 0, %s65
      %s83 = sphi 0, %s83
      %s85 = sphi 0, %s83
      %s86 = sphi 0, %s85
      %s100 = sphi 0, %s86
      %s104 = sphi 0, %s104
      %s106 = sphi 0, %s104
      %s107 = sphi 0, %s106
      %s121 = sphi 0, %s107
      %s127 = sphi 0, %s129
      %s130 = sphi 0, %s127
      %s131 = sphi 0, %s130
      %s147 = sphi 0, %s131
      %s153 = sphi 0, %s155
      %s156 = sphi 0, %s153
      %s157 = sphi 0, %s156
      %s173 = sphi 0, %s157
      %s181 = sphi 0, %s183
      %s184 = sphi 0, %s181
      %s185 = sphi 0, %s184
      %s201 = sphi 0, %s185
    $region4: #{qwen2_decoder_layer.3} parent=1 // loop_header_branch
      %17 = sbr.rel (%p15) target = $region8
    $region5: #{qwen2_decoder_layer.3} parent=1 // loop_body
      %s19 = ssub.s32 %s14, 1
      %s20 = ssub.s32 %s14, 2
      %s27 = sadd.s32 1, %s22
      %p28 = scmp.ge.s32.totalorder %s27, 1
      %s29 = scalar_select %p28, 0, %s27
      %s30 = sadd.s32 1, %s21
      %s31 = scalar_select %p28, %s30, %s21
      %p32 = scmp.ge.s32.totalorder %s31, 2
      %s33 = scalar_select %p32, 0, %s31
      %s34 = ssub.s32 %s21, %s33
      %s35 = ssub.s32 %s22, %s29
      %s36 = sor.u32 %s34, %s35
      %p37 = scmp.eq.s32.totalorder %s36, 0
      %s39 = sadd.s32 %s38, 1
      %s40 = scalar_select %p37, %s38, %s39
      %p43 = pneg %p37
      %p44 = scmp.eq.s32.totalorder %s14, 1
      %p45 = por %p43, %p44
      %p46 = scmp.ne.s32.totalorder %s38, %s41
      %p47 = scmp.eq.s32.totalorder %s14, 0
      %p48 = por %p46, %p47
      %p49 = scmp.ne.s32.totalorder %s38, %s41
      %p50 = scmp.eq.s32.totalorder %s19, 1
      %p51 = por %p49, %p50
      %p52 = scmp.ne.s32.totalorder %s41, %s42
      %p53 = scmp.eq.s32.totalorder %s19, 0
      %p54 = por %p52, %p53
      %p55 = scmp.ne.s32.totalorder %s41, %s42
      %p56 = scmp.eq.s32.totalorder %s20, 1
      %p57 = por %p55, %p56
      %p59 = scmp.ne.s32.totalorder %s42, %s58
      %p60 = scmp.eq.s32.totalorder %s20, 0
      %p61 = por %p59, %p60
      %s63 = sadd.s32 %s62, 1
      %p66 = scmp.eq.s32.totalorder %s14, 1
      %p67 = scmp.ne.s32.totalorder %s62, %s64
      %p68 = scmp.eq.s32.totalorder %s14, 0
      %p69 = por %p67, %p68
      %p70 = scmp.ne.s32.totalorder %s62, %s64
      %p71 = scmp.eq.s32.totalorder %s19, 1
      %p72 = por %p70, %p71
      %p73 = scmp.ne.s32.totalorder %s64, %s65
      %p74 = scmp.eq.s32.totalorder %s19, 0
      %p75 = por %p73, %p74
      %p76 = scmp.ne.s32.totalorder %s64, %s65
      %p77 = scmp.eq.s32.totalorder %s20, 1
      %p78 = por %p76, %p77
      %p80 = scmp.ne.s32.totalorder %s65, %s79
      %p81 = scmp.eq.s32.totalorder %s20, 0
      %p82 = por %p80, %p81
      %s84 = sadd.s32 %s83, 1
      %p87 = scmp.eq.s32.totalorder %s14, 1
      %p88 = scmp.ne.s32.totalorder %s83, %s85
      %p89 = scmp.eq.s32.totalorder %s14, 0
      %p90 = por %p88, %p89
      %p91 = scmp.ne.s32.totalorder %s83, %s85
      %p92 = scmp.eq.s32.totalorder %s19, 1
      %p93 = por %p91, %p92
      %p94 = scmp.ne.s32.totalorder %s85, %s86
      %p95 = scmp.eq.s32.totalorder %s19, 0
      %p96 = por %p94, %p95
      %p97 = scmp.ne.s32.totalorder %s85, %s86
      %p98 = scmp.eq.s32.totalorder %s20, 1
      %p99 = por %p97, %p98
      %p101 = scmp.ne.s32.totalorder %s86, %s100
      %p102 = scmp.eq.s32.totalorder %s20, 0
      %p103 = por %p101, %p102
      %s105 = sadd.s32 %s104, 1
      %p108 = scmp.eq.s32.totalorder %s14, 1
      %p109 = scmp.ne.s32.totalorder %s104, %s106
      %p110 = scmp.eq.s32.totalorder %s14, 0
      %p111 = por %p109, %p110
      %p112 = scmp.ne.s32.totalorder %s104, %s106
      %p113 = scmp.eq.s32.totalorder %s19, 1
      %p114 = por %p112, %p113
      %p115 = scmp.ne.s32.totalorder %s106, %s107
      %p116 = scmp.eq.s32.totalorder %s19, 0
      %p117 = por %p115, %p116
      %p118 = scmp.ne.s32.totalorder %s106, %s107
      %p119 = scmp.eq.s32.totalorder %s20, 1
      %p120 = por %p118, %p119
      %p122 = scmp.ne.s32.totalorder %s107, %s121
      %p123 = scmp.eq.s32.totalorder %s20, 0
      %p124 = por %p122, %p123
      %s125 = ssub.s32 %s22, %s29
      %p126 = scmp.eq.s32.totalorder %s125, 0
      %s128 = sadd.s32 %s127, 1
      %s129 = scalar_select %p126, %s127, %s128
      %p132 = pneg %p126
      %p133 = scmp.eq.s32.totalorder %s14, 1
      %p134 = por %p132, %p133
      %p135 = scmp.ne.s32.totalorder %s127, %s130
      %p136 = scmp.eq.s32.totalorder %s14, 0
      %p137 = por %p135, %p136
      %p138 = scmp.ne.s32.totalorder %s127, %s130
      %p139 = scmp.eq.s32.totalorder %s19, 1
      %p140 = por %p138, %p139
      %p141 = scmp.ne.s32.totalorder %s130, %s131
      %p142 = scmp.eq.s32.totalorder %s19, 0
      %p143 = por %p141, %p142
      %p144 = scmp.ne.s32.totalorder %s130, %s131
      %p145 = scmp.eq.s32.totalorder %s20, 1
      %p146 = por %p144, %p145
      %p148 = scmp.ne.s32.totalorder %s131, %s147
      %p149 = scmp.eq.s32.totalorder %s20, 0
      %p150 = por %p148, %p149
      %s151 = ssub.s32 %s22, %s29
      %p152 = scmp.eq.s32.totalorder %s151, 0
      %s154 = sadd.s32 %s153, 1
      %s155 = scalar_select %p152, %s153, %s154
      %p158 = pneg %p152
      %p159 = scmp.eq.s32.totalorder %s14, 1
      %p160 = por %p158, %p159
      %p161 = scmp.ne.s32.totalorder %s153, %s156
      %p162 = scmp.eq.s32.totalorder %s14, 0
      %p163 = por %p161, %p162
      %p164 = scmp.ne.s32.totalorder %s153, %s156
      %p165 = scmp.eq.s32.totalorder %s19, 1
      %p166 = por %p164, %p165
      %p167 = scmp.ne.s32.totalorder %s156, %s157
      %p168 = scmp.eq.s32.totalorder %s19, 0
      %p169 = por %p167, %p168
      %p170 = scmp.ne.s32.totalorder %s156, %s157
      %p171 = scmp.eq.s32.totalorder %s20, 1
      %p172 = por %p170, %p171
      %p174 = scmp.ne.s32.totalorder %s157, %s173
      %p175 = scmp.eq.s32.totalorder %s20, 0
      %p176 = por %p174, %p175
      %s177 = ssub.s32 %s21, %s33
      %s178 = ssub.s32 %s22, %s29
      %s179 = sor.u32 %s177, %s178
      %p180 = scmp.eq.s32.totalorder %s179, 0
      %s182 = sadd.s32 %s181, 1
      %s183 = scalar_select %p180, %s181, %s182
      %p186 = pneg %p180
      %p187 = scmp.eq.s32.totalorder %s14, 1
      %p188 = por %p186, %p187
      %p189 = scmp.ne.s32.totalorder %s181, %s184
      %p190 = scmp.eq.s32.totalorder %s14, 0
      %p191 = por %p189, %p190
      %p192 = scmp.ne.s32.totalorder %s181, %s184
      %p193 = scmp.eq.s32.totalorder %s19, 1
      %p194 = por %p192, %p193
      %p195 = scmp.ne.s32.totalorder %s184, %s185
      %p196 = scmp.eq.s32.totalorder %s19, 0
      %p197 = por %p195, %p196
      %p198 = scmp.ne.s32.totalorder %s184, %s185
      %p199 = scmp.eq.s32.totalorder %s20, 1
      %p200 = por %p198, %p199
      %p202 = scmp.ne.s32.totalorder %s185, %s201
      %p203 = scmp.eq.s32.totalorder %s20, 0
      %p204 = por %p202, %p203
      %p205 = scmp.le.s32.totalorder 1, %s14
      %p206 = scmp.lt.s32.totalorder %s14, 3
      %p207 = pnand %p205, %p206
      %p208 = pneg %p207
      // Predicated region
      $region9: #{qwen2_decoder_layer.3} parent=5 // pred_check
        _
      $region10: #{qwen2_decoder_layer.3} parent=5 // pred_check_branch
        %210 = sbr.rel (%p207) target = $region12
      $region11: #{qwen2_decoder_layer.3} parent=5 // pred_region
        %s211 = ssub.s32 %s14, 1
        // Predicated region
        $region13: #{qwen2_decoder_layer.3} parent=11 // pred_check
          %p212 = pneg %p75
        $region14: #{qwen2_decoder_layer.3} parent=11 // pred_check_branch
          %214 = sbr.rel (%p212) target = $region16
        $region15: #{qwen2_decoder_layer.3} parent=11 // pred_region
          _
        $region16: #{qwen2_decoder_layer.3} parent=11 // pred_fallthru
          _
        // Predicated region
        $region17: #{qwen2_decoder_layer.3} parent=11 // pred_check
          %p215 = pneg %p96
        $region18: #{qwen2_decoder_layer.3} parent=11 // pred_check_branch
          %217 = sbr.rel (%p215) target = $region20
        $region19: #{qwen2_decoder_layer.3} parent=11 // pred_region
          %s219 = ssub.s32 256, 256
          %220 = vsyncadd [#allocation3], %s219
          %s221 = sshll.u32 [#allocation2], 4
          %s222 = int_to_ptr.vmem [resolvable:$true] %s221
          %227 = dma.hbm_to_vmem [thread:$0]  %s2, 256, %s222, [#allocation3], 64, 64, 4
        $region20: #{qwen2_decoder_layer.3} parent=11 // pred_fallthru
          _
        // Predicated region
        $region21: #{qwen2_decoder_layer.3} parent=11 // pred_check
          %p228 = pneg %p117
        $region22: #{qwen2_decoder_layer.3} parent=11 // pred_check_branch
          %230 = sbr.rel (%p228) target = $region24
        $region23: #{qwen2_decoder_layer.3} parent=11 // pred_region
          %s232 = ssub.s32 16, 16
          %233 = vsyncadd [#allocation5], %s232
          %s235 = sshll.u32 [#allocation4], 4
          %s236 = int_to_ptr.vmem [resolvable:$true] %s235
          %238 = dma.hbm_to_vmem [thread:$0]  %s3, 16, %s236, [#allocation5]
        $region24: #{qwen2_decoder_layer.3} parent=11 // pred_fallthru
          _
        // Predicated region
        $region25: #{qwen2_decoder_layer.3} parent=11 // pred_check
          %p239 = pneg %p143
        $region26: #{qwen2_decoder_layer.3} parent=11 // pred_check_branch
          %241 = sbr.rel (%p239) target = $region28
        $region27: #{qwen2_decoder_layer.3} parent=11 // pred_region
          %p242 = scmp.lt.s32.totalorder %s24, 0
          %s243 = scalar_select %p242, %s24, 0
          %s244 = smul.addr %s243, 8
          %s245 = scalar_lea.vmem %s4, %s244
        $region28: #{qwen2_decoder_layer.3} parent=11 // pred_fallthru
          _
        // Predicated region
        $region29: #{qwen2_decoder_layer.3} parent=11 // pred_check
          %p246 = pneg %p169
        $region30: #{qwen2_decoder_layer.3} parent=11 // pred_check_branch
          %248 = sbr.rel (%p246) target = $region32
        $region31: #{qwen2_decoder_layer.3} parent=11 // pred_region
          %s250 = ssub.s32 128, 128
          %251 = vsyncadd [#allocation5], %s250
          %s252 = smul.addr %s24, 128
          %s253 = scalar_lea.hbm %s5, %s252
          %s255 = sshll.u32 [#allocation6], 4
          %s256 = int_to_ptr.vmem [resolvable:$true] %s255
          %258 = dma.hbm_to_vmem [thread:$0]  %s253, 128, %s256, [#allocation5]
        $region32: #{qwen2_decoder_layer.3} parent=11 // pred_fallthru
          _
      $region12: #{qwen2_decoder_layer.3} parent=5 // pred_fallthru
        _
      %p259 = scmp.lt.s32.totalorder %s14, 2
      // Predicated region
      $region33: #{qwen2_decoder_layer.3} parent=5 // pred_check
        %p260 = pneg %p259
      $region34: #{qwen2_decoder_layer.3} parent=5 // pred_check_branch
        %262 = sbr.rel (%p260) target = $region36
      $region35: #{qwen2_decoder_layer.3} parent=5 // pred_region
        // Predicated region
        $region37: #{qwen2_decoder_layer.3} parent=35 // pred_check
          %p263 = pneg %p48
        $region38: #{qwen2_decoder_layer.3} parent=35 // pred_check_branch
          %265 = sbr.rel (%p263) target = $region40
        $region39: #{qwen2_decoder_layer.3} parent=35 // pred_region
          %p266 = scmp.lt.s32.totalorder %s21, 1
          %s267 = scalar_select %p266, %s21, 1
          %p268 = scmp.lt.s32.totalorder %s22, 0
          %s269 = scalar_select %p268, %s22, 0
          %s270 = sadd.s32 %s269, %s267
          %s271 = smul.addr %s270, 8
          %s272 = scalar_lea.vmem %s0, %s271
        $region40: #{qwen2_decoder_layer.3} parent=35 // pred_fallthru
          _
      $region36: #{qwen2_decoder_layer.3} parent=5 // pred_fallthru
        _
      %p273 = scmp.le.s32.totalorder 1, %s14
      %p274 = scmp.lt.s32.totalorder %s14, 3
      %p275 = pnand %p273, %p274
      %p276 = pneg %p275
      // Predicated region
      $region41: #{qwen2_decoder_layer.3} parent=5 // pred_check
        _
      $region42: #{qwen2_decoder_layer.3} parent=5 // pred_check_branch
        %278 = sbr.rel (%p275) target = $region44
      $region43: #{qwen2_decoder_layer.3} parent=5 // pred_region
        %s279 = ssub.s32 %s14, 1
        // Predicated region
        $region45: #{qwen2_decoder_layer.3} parent=43 // pred_check
          %p280 = pneg %p96
        $region46: #{qwen2_decoder_layer.3} parent=43 // pred_check_branch
          %282 = sbr.rel (%p280) target = $region48
        $region47: #{qwen2_decoder_layer.3} parent=43 // pred_region
          %283 = dma.done [#allocation3], 256
        $region48: #{qwen2_decoder_layer.3} parent=43 // pred_fallthru
          _
        // Predicated region
        $region49: #{qwen2_decoder_layer.3} parent=43 // pred_check
          %p284 = pneg %p117
        $region50: #{qwen2_decoder_layer.3} parent=43 // pred_check_branch
          %286 = sbr.rel (%p284) target = $region52
        $region51: #{qwen2_decoder_layer.3} parent=43 // pred_region
          %287 = dma.done [#allocation5], 16
        $region52: #{qwen2_decoder_layer.3} parent=43 // pred_fallthru
          _
        // Predicated region
        $region53: #{qwen2_decoder_layer.3} parent=43 // pred_check
          %p288 = pneg %p169
        $region54: #{qwen2_decoder_layer.3} parent=43 // pred_check_branch
          %290 = sbr.rel (%p288) target = $region56
        $region55: #{qwen2_decoder_layer.3} parent=43 // pred_region
          %291 = dma.done [#allocation5], 128
        $region56: #{qwen2_decoder_layer.3} parent=43 // pred_fallthru
          _
        %p292 = scmp.lt.s32.totalorder %s23, 1
        %s293 = scalar_select %p292, %s23, 1
        %p294 = scmp.lt.s32.totalorder %s24, 0
        %s295 = scalar_select %p294, %s24, 0
        %s296 = sadd.s32 %s295, %s293
        %s297 = smul.addr %s296, 8
        %s298 = scalar_lea.vmem %s0, %s297
        %p299 = pneg %p54
        %p300 = pneg %p51
        %p301 = pneg %p75
        %p302 = pneg %p72
        %p303 = pneg %p96
        %p304 = pneg %p93
        %p305 = pneg %p117
        %p306 = pneg %p114
        %p307 = scmp.lt.s32.totalorder %s24, 0
        %s308 = scalar_select %p307, %s24, 0
        %s309 = smul.addr %s308, 8
        %s310 = scalar_lea.vmem %s4, %s309
        %p311 = pneg %p143
        %p312 = pneg %p140
        %p313 = pneg %p169
        %p314 = pneg %p166
        %p315 = pneg %p197
        %p316 = pneg %p194
        %p317 = scmp.lt.s32.totalorder %s23, 1
        %s318 = scalar_select %p317, %s23, 1
        %p319 = scmp.lt.s32.totalorder %s24, 0
        %s320 = scalar_select %p319, %s24, 0
        %s321 = sadd.s32 %s320, %s318
        %s322 = smul.addr %s321, 4
        %s323 = scalar_lea.vmem %s6, %s322
        %p324 = scmp.lt.s32.totalorder %s23, 1
        %s325 = scalar_select %p324, %s23, 1
        %p326 = scmp.lt.s32.totalorder %s24, 0
        %s327 = scalar_select %p326, %s24, 0
        %s328 = sadd.s32 %s327, %s325
        %s329 = smul.addr %s328, 8
        %s330 = scalar_lea.vmem %s0, %s329
        %p331 = scmp.lt.s32.totalorder %s24, 0
        %s332 = scalar_select %p331, %s24, 0
        %s333 = smul.addr %s332, 8
        %s334 = scalar_lea.vmem %s4, %s333
        %p335 = scmp.lt.s32.totalorder %s23, 1
        %s336 = scalar_select %p335, %s23, 1
        %p337 = scmp.lt.s32.totalorder %s24, 0
        %s338 = scalar_select %p337, %s24, 0
        %s339 = sadd.s32 %s338, %s336
        %s340 = smul.addr %s339, 4
        %s341 = scalar_lea.vmem %s6, %s340
        %v343 = vld [vmem:[%s330] sm:$0xff]
        %v344 = vmul.f32 %v343, %v343
        %vm345 = vcmask 261120
        %v346 = vsel %vm345, %v344, 0.0
        %347 = vadd.xlane.f32.xlu0 %v346
        %v348 = vpop.xlane.xlu0 %347
        %v349 = vrcp.pop 32.0
        %v350 = vmul.f32 %v348, %v349
        %v351 = vadd.f32 %v350, 1e-06
        %v352 = vrsqrt.pop %v351
        %v353 = vmul.f32 %v343, %v352
        %v354 = vld [vmem:[%s1] sm:$0x1]
        %v356 = vlaneseq
        %v357 = vshrl.u32 %v356, 7
        %v358 = vsub.s32 0, %v357
        %v359 = vrot.slane %v354, %v358
        %v361 = vmul.f32 %v353, %v359
        %v362 = vpack.c.bf16 %v361, %v361
        %v363 = vld [vmem:[#allocation2] sm:$0xf]
        %v364 = vld [vmem:[#allocation2 + $0x4] sm:$0xf]
        %v365 = vld [vmem:[#allocation2 + $0x8] sm:$0xf]
        %v366 = vld [vmem:[#allocation2 + $0xc] sm:$0xf]
        %v367 = vld [vmem:[#allocation4] sm:$0x1]
        %v369 = vlaneseq
        %v370 = vshrl.u32 %v369, 7
        %v371 = vsub.s32 0, %v370
        %v372 = vrot.slane %v367, %v371
        %v378 = vunpack.c.l.b16 %v363
        %v379 = vunpack.c.l.b16 %v364
        %v380 = vunpack.c.l.b16 %v365
        %v381 = vunpack.c.l.b16 %v366
        %v382 = vpack.c.b16 %v379, %v378
        %v383 = vpack.c.b16 %v381, %v380
        %v387 = vsel %vm345, %v362, 0
        %389 = vmatprep.subr.bf16.mxu0 0
        %390 = vmatpush1.bf16.msra.mxu0 0
        %391 = vmatprep.subr.bf16.mxu0 0
        %392 = vmatpush1.bf16.msra.mxu0 0
        %393 = vmatprep.subr.bf16.mxu0 0
        %394 = vmatpush1.bf16.msra.mxu0 0
        %395 = vmatprep.subr.bf16.mxu0 0
        %396 = vmatpush1.bf16.msra.mxu0 0
        %397 = vmatprep.subr.bf16.mxu0 0
        %398 = vmatpush1.bf16.msra.mxu0 0
        %399 = vmatprep.subr.bf16.mxu0 0
        %400 = vmatpush1.bf16.msra.mxu0 0
        %401 = vmatprep.subr.bf16.mxu0 0
        %402 = vmatpush1.bf16.msra.mxu0 %v383
        %403 = vmatprep.subr.bf16.mxu0 0
        %404 = vmatpush1.bf16.msra.mxu0 %v382
        %405 = vmatprep.subr.bf16.mxu0 0
        %406 = vmatpush2.bf16.msra.mxu0 0
        %407 = vmatprep.subr.bf16.mxu0 0
        %408 = vmatpush2.bf16.msra.mxu0 0
        %409 = vmatprep.subr.bf16.mxu0 0
        %410 = vmatpush2.bf16.msra.mxu0 0
        %411 = vmatprep.subr.bf16.mxu0 0
        %412 = vmatpush2.bf16.msra.mxu0 0
        %413 = vmatprep.subr.bf16.mxu0 0
        %414 = vmatpush2.bf16.msra.mxu0 0
        %415 = vmatprep.subr.bf16.mxu0 0
        %416 = vmatpush2.bf16.msra.mxu0 0
        %417 = vmatprep.subr.bf16.mxu0 0
        %418 = vmatpush2.bf16.msra.mxu0 0
        %419 = vmatprep.subr.bf16.mxu0 0
        %420 = vmatpush2.bf16.msra.mxu0 0
        %421 = vmatprep.mubr.bf16.mxu0 0
        %422 = vmatmul.mubr.bf16.gmra.mxu0 %v387
        %v423 = vpop.f32.mrf.mxu0
        %v424 = vadd.f32 %v372, %v423
        %v425 = vpop.f32.mrf.mxu0
        %v426 = vpop.f32.mrf.mxu0
        %v427 = vpop.f32.mrf.mxu0
        %428 = vdwg.mxu0
        %430 = vrot.lane.b32.xlu0 %v424, 68
        %v431 = vpop.permute.xlu0 %430
        %433 = vrot.lane.b32.xlu0 %v424, 4
        %v434 = vpop.permute.xlu0 %433
        %vm436 = vcmask 31744
        %v437 = vsel %vm436, %v431, %v434
        %438 = vrot.lane.b32.xlu0 %v424, 124
        %v439 = vpop.permute.xlu0 %438
        %441 = vrot.lane.b32.xlu0 %v424, 60
        %v442 = vpop.permute.xlu0 %441
        %vm444 = vcmask 490496
        %v445 = vsel %vm444, %v439, %v442
        %v446 = vlaneseq
        %v447 = vand.u32 %v446, 127
        %vm448 = vcmp.lt.s32.totalorder %v447, 0
        %v449 = vsub.s32 0, %v447
        %v450 = vsel %vm448, %v449, %v447
        %v451 = vshrl.u32 %v450, 3
        %v452 = vand.u32 %v450, 7
        %v453 = vsub.s32 0, %v452
        %v454 = vsel %vm448, %v453, %v452
        %vm455 = vcmp.ne.s32.totalorder %v454, 0
        %vm456 = vcmp.lt.s32.totalorder %v454, 0
        %vm457 = vmand %vm456, %vm455
        %v458 = vadd.s32 %v454, 8
        %v459 = vsel %vm457, %v458, %v454
        %vm460 = vcmp.lt.s32.totalorder %v459, 4
        %v461 = vsel %vm460, %v445, %v437
        %v462 = vld [vmem:[%s334] sm:$0xff]
        %v463 = vmul.f32 %v424, %v462
        %v464 = vld [vmem:[#allocation6] sm:$0xff]
        %v465 = vmul.f32 %v461, %v464
        %v466 = vadd.f32 %v463, %v465
        %v467 = vpack.c.bf16 %v466, %v466
        %vm468 = vcmask 519168
        %469 = vst.msk [vmem:[%s341] sm:$0xf] %vm468, %v467
        %p470 = scmp.lt.s32.totalorder %s23, 1
        %s471 = scalar_select %p470, %s23, 1
        %p472 = scmp.lt.s32.totalorder %s24, 0
        %s473 = scalar_select %p472, %s24, 0
        %s474 = sadd.s32 %s473, %s471
        %s475 = smul.addr %s474, 4
        %s476 = scalar_lea.vmem %s6, %s475
        // Predicated region
        $region57: #{qwen2_decoder_layer.3} parent=43 // pred_check
          %p477 = pneg %p194
        $region58: #{qwen2_decoder_layer.3} parent=43 // pred_check_branch
          %479 = sbr.rel (%p477) target = $region60
        $region59: #{qwen2_decoder_layer.3} parent=43 // pred_region
          _
        $region60: #{qwen2_decoder_layer.3} parent=43 // pred_fallthru
          _
      $region44: #{qwen2_decoder_layer.3} parent=5 // pred_fallthru
        _
      %p480 = scmp.le.s32.totalorder 2, %s14
      // Predicated region
      $region61: #{qwen2_decoder_layer.3} parent=5 // pred_check
        %p481 = pneg %p480
      $region62: #{qwen2_decoder_layer.3} parent=5 // pred_check_branch
        %483 = sbr.rel (%p481) target = $region64
      $region63: #{qwen2_decoder_layer.3} parent=5 // pred_region
        %s484 = ssub.s32 %s14, 2
        // Predicated region
        $region65: #{qwen2_decoder_layer.3} parent=63 // pred_check
          %p485 = pneg %p200
        $region66: #{qwen2_decoder_layer.3} parent=63 // pred_check_branch
          %487 = sbr.rel (%p485) target = $region68
        $region67: #{qwen2_decoder_layer.3} parent=63 // pred_region
          %p488 = scmp.lt.s32.totalorder %s25, 1
          %s489 = scalar_select %p488, %s25, 1
          %p490 = scmp.lt.s32.totalorder %s26, 0
          %s491 = scalar_select %p490, %s26, 0
          %s492 = sadd.s32 %s491, %s489
          %s493 = smul.addr %s492, 4
          %s494 = scalar_lea.vmem %s6, %s493
        $region68: #{qwen2_decoder_layer.3} parent=63 // pred_fallthru
          _
      $region64: #{qwen2_decoder_layer.3} parent=5 // pred_fallthru
        _
    $region6: #{qwen2_decoder_layer.3} parent=1 // loop_footer
      %s18 = sadd.s32 1, %s14
    $region7: #{qwen2_decoder_layer.3} parent=1 // loop_footer_branch
      %13 = sbr.rel target = $region3
    $region8: #{qwen2_decoder_layer.3} parent=1 // loop_exit
      _
    %495 = vsyncpa [#allocation3], 1
    %s496 = scalar_lea.sflag [#allocation3], 1
    %497 = vsyncpa %s496, 1
    %498 = vsyncpa [#allocation5], 1

// kernel: qwen2_decoder_layer.5
$region0: #{qwen2_decoder_layer.5}
  #allocation0 [shape = 'u32[]', space=smem, size = 0x4, offset = 0x4, fixed_abs, tag = 'smem constant byte address 0x4 - core index']
  #allocation1 [shape = 'u32[144,128]{1,0:T(1,128)}', space=vmem, size = 0x12000, scoped, tag = 'internal scratch']
  %s0 = inlined_call_operand.vmem [shape: bf16[16,32], index: 0, kind: input, shape index: {}]
  %s1 = inlined_call_operand.vmem [shape: bf16[32,32], index: 1, kind: input, shape index: {}]
  %s2 = inlined_call_operand.vmem [shape: f32[16,32], index: 2, kind: input, shape index: {}]
  %s3 = inlined_call_operand.vmem [shape: f32[1,32], index: 3, kind: input, shape index: {}]
  %s4 = inlined_call_operand.vmem [shape: bf16[32,128], index: 4, kind: input, shape index: {}]
  %s5 = inlined_call_operand.vmem [shape: bf16[64,32], index: 5, kind: input, shape index: {}]
  %s6 = inlined_call_operand.hbm [shape: f32[16,32], index: 6, kind: output, shape index: {}]
  %s7 = sld [smem:[#allocation0]]
  $region34: #{qwen2_decoder_layer.5} parent=0
    _
  %s9 = ssub.s32 1, %s7
  %s10 = scalar_select 0, %s9, %s7
  $region1: #{qwen2_decoder_layer.5} parent=0
    #allocation2 [shape = 'u8[8192]{0}', space=vmem, size = 0x2000, scoped, tag = 'output window, operand 0, single buffered']
    #allocation3 [shape = 's32[1]{0}', space=sflag, size = 0x4, scoped, tag = 'scoped memory for qwen2_decoder_layer.5']
    %11 = vsyncpa [#allocation3], 0
    // Predicated region
    $region2: #{qwen2_decoder_layer.5} parent=1 // pred_check
      _
    $region3: #{qwen2_decoder_layer.5} parent=1 // pred_check_branch
      %13 = sbr.rel (0) target = $region5
    $region4: #{qwen2_decoder_layer.5} parent=1 // pred_region
      _
    $region5: #{qwen2_decoder_layer.5} parent=1 // pred_fallthru
      _
    // Predicated region
    $region6: #{qwen2_decoder_layer.5} parent=1 // pred_check
      _
    $region7: #{qwen2_decoder_layer.5} parent=1 // pred_check_branch
      %15 = sbr.rel (0) target = $region9
    $region8: #{qwen2_decoder_layer.5} parent=1 // pred_region
      _
    $region9: #{qwen2_decoder_layer.5} parent=1 // pred_fallthru
      _
    // Predicated region
    $region10: #{qwen2_decoder_layer.5} parent=1 // pred_check
      _
    $region11: #{qwen2_decoder_layer.5} parent=1 // pred_check_branch
      %17 = sbr.rel (0) target = $region13
    $region12: #{qwen2_decoder_layer.5} parent=1 // pred_region
      _
    $region13: #{qwen2_decoder_layer.5} parent=1 // pred_fallthru
      _
    // Predicated region
    $region14: #{qwen2_decoder_layer.5} parent=1 // pred_check
      _
    $region15: #{qwen2_decoder_layer.5} parent=1 // pred_check_branch
      %19 = sbr.rel (0) target = $region17
    $region16: #{qwen2_decoder_layer.5} parent=1 // pred_region
      _
    $region17: #{qwen2_decoder_layer.5} parent=1 // pred_fallthru
      _
    // Predicated region
    $region18: #{qwen2_decoder_layer.5} parent=1 // pred_check
      _
    $region19: #{qwen2_decoder_layer.5} parent=1 // pred_check_branch
      %21 = sbr.rel (0) target = $region21
    $region20: #{qwen2_decoder_layer.5} parent=1 // pred_region
      _
    $region21: #{qwen2_decoder_layer.5} parent=1 // pred_fallthru
      _
    // Predicated region
    $region22: #{qwen2_decoder_layer.5} parent=1 // pred_check
      _
    $region23: #{qwen2_decoder_layer.5} parent=1 // pred_check_branch
      %23 = sbr.rel (0) target = $region25
    $region24: #{qwen2_decoder_layer.5} parent=1 // pred_region
      _
    $region25: #{qwen2_decoder_layer.5} parent=1 // pred_fallthru
      _
    %v25 = vld [vmem:[%s0] sm:$0xf]
    %v26 = vld [vmem:[%s0 + $0x4] sm:$0xf]
    %v27 = vld [vmem:[%s1] sm:$0xf]
    %v28 = vld [vmem:[%s1 + $0x4] sm:$0xf]
    %v29 = vld [vmem:[%s1 + $0x8] sm:$0xf]
    %v30 = vld [vmem:[%s1 + $0xc] sm:$0xf]
    %v31 = vld [vmem:[%s2] sm:$0xff]
    %v32 = vld [vmem:[%s2 + $0x8] sm:$0xff]
    %v35 = vunpack.c.l.b16 %v25
    %v36 = vunpack.c.l.b16 %v26
    %v37 = vpack.c.b16 %v36, %v35
    %v42 = vunpack.c.l.b16 %v27
    %v43 = vunpack.c.l.b16 %v28
    %v44 = vunpack.c.l.b16 %v29
    %v45 = vunpack.c.l.b16 %v30
    %v46 = vpack.c.b16 %v43, %v42
    %v47 = vpack.c.b16 %v45, %v44
    %vm50 = vcmask 261120
    %v52 = vsel %vm50, %v37, 0
    %54 = vmatprep.subr.bf16.mxu0 0
    %55 = vmatpush1.bf16.msra.mxu0 0
    %56 = vmatprep.subr.bf16.mxu0 0
    %57 = vmatpush1.bf16.msra.mxu0 0
    %58 = vmatprep.subr.bf16.mxu0 0
    %59 = vmatpush1.bf16.msra.mxu0 0
    %60 = vmatprep.subr.bf16.mxu0 0
    %61 = vmatpush1.bf16.msra.mxu0 0
    %62 = vmatprep.subr.bf16.mxu0 0
    %63 = vmatpush1.bf16.msra.mxu0 0
    %64 = vmatprep.subr.bf16.mxu0 0
    %65 = vmatpush1.bf16.msra.mxu0 0
    %66 = vmatprep.subr.bf16.mxu0 0
    %67 = vmatpush1.bf16.msra.mxu0 %v47
    %68 = vmatprep.subr.bf16.mxu0 0
    %69 = vmatpush1.bf16.msra.mxu0 %v46
    %70 = vmatprep.subr.bf16.mxu0 0
    %71 = vmatpush2.bf16.msra.mxu0 0
    %72 = vmatprep.subr.bf16.mxu0 0
    %73 = vmatpush2.bf16.msra.mxu0 0
    %74 = vmatprep.subr.bf16.mxu0 0
    %75 = vmatpush2.bf16.msra.mxu0 0
    %76 = vmatprep.subr.bf16.mxu0 0
    %77 = vmatpush2.bf16.msra.mxu0 0
    %78 = vmatprep.subr.bf16.mxu0 0
    %79 = vmatpush2.bf16.msra.mxu0 0
    %80 = vmatprep.subr.bf16.mxu0 0
    %81 = vmatpush2.bf16.msra.mxu0 0
    %82 = vmatprep.subr.bf16.mxu0 0
    %83 = vmatpush2.bf16.msra.mxu0 0
    %84 = vmatprep.subr.bf16.mxu0 0
    %85 = vmatpush2.bf16.msra.mxu0 0
    %86 = vmatprep.mubr.bf16.mxu0 0
    %87 = vmatmul.mubr.bf16.gmra.mxu0 %v52
    %v88 = vpop.f32.mrf.mxu0
    %v89 = vadd.f32 %v31, %v88
    %v90 = vpop.f32.mrf.mxu0
    %v91 = vpop.f32.mrf.mxu0
    %v92 = vadd.f32 %v32, %v91
    %v93 = vpop.f32.mrf.mxu0
    %94 = vdwg.mxu0
    %v95 = vmul.f32 %v89, %v89
    %v96 = vmul.f32 %v92, %v92
    %v97 = vsel %vm50, %v95, 0.0
    %98 = vadd.xlane.f32.xlu0 %v97
    %v99 = vpop.xlane.xlu0 %98
    %v100 = vsel %vm50, %v96, 0.0
    %101 = vadd.xlane.f32.xlu0 %v100
    %v102 = vpop.xlane.xlu0 %101
    %v103 = vrcp.pop 32.0
    %v104 = vmul.f32 %v99, %v103
    %v105 = vmul.f32 %v102, %v103
    %v106 = vadd.f32 %v104, 1e-06
    %v107 = vadd.f32 %v105, 1e-06
    %v108 = vrsqrt.pop %v106
    %v109 = vrsqrt.pop %v107
    %v110 = vmul.f32 %v89, %v108
    %v111 = vmul.f32 %v92, %v109
    %v112 = vld [vmem:[%s3] sm:$0x1]
    %v114 = vlaneseq
    %v115 = vshrl.u32 %v114, 7
    %v116 = vsub.s32 0, %v115
    %v117 = vrot.slane %v112, %v116
    %v119 = vmul.f32 %v110, %v117
    %v120 = vmul.f32 %v111, %v117
    %v121 = vpack.c.bf16 %v120, %v119
    %v122 = vld [vmem:[%s4] sm:$0xf]
    %v123 = vld [vmem:[%s4 + $0x4] sm:$0xf]
    %v124 = vld [vmem:[%s4 + $0x8] sm:$0xf]
    %v125 = vld [vmem:[%s4 + $0xc] sm:$0xf]
    %v130 = vunpack.c.l.b16 %v122
    %v131 = vunpack.c.l.b16 %v123
    %v132 = vunpack.c.l.b16 %v124
    %v133 = vunpack.c.l.b16 %v125
    %v134 = vpack.c.b16 %v131, %v130
    %v135 = vpack.c.b16 %v133, %v132
    %v139 = vsel %vm50, %v121, 0
    %141 = vmatprep.subr.bf16.mxu0 0
    %142 = vmatpush1.bf16.msra.mxu0 0
    %143 = vmatprep.subr.bf16.mxu0 0
    %144 = vmatpush1.bf16.msra.mxu0 0
    %145 = vmatprep.subr.bf16.mxu0 0
    %146 = vmatpush1.bf16.msra.mxu0 0
    %147 = vmatprep.subr.bf16.mxu0 0
    %148 = vmatpush1.bf16.msra.mxu0 0
    %149 = vmatprep.subr.bf16.mxu0 0
    %150 = vmatpush1.bf16.msra.mxu0 0
    %151 = vmatprep.subr.bf16.mxu0 0
    %152 = vmatpush1.bf16.msra.mxu0 0
    %153 = vmatprep.subr.bf16.mxu0 0
    %154 = vmatpush1.bf16.msra.mxu0 %v135
    %155 = vmatprep.subr.bf16.mxu0 0
    %156 = vmatpush1.bf16.msra.mxu0 %v134
    %157 = vmatprep.subr.bf16.mxu0 0
    %158 = vmatpush2.bf16.msra.mxu0 0
    %159 = vmatprep.subr.bf16.mxu0 0
    %160 = vmatpush2.bf16.msra.mxu0 0
    %161 = vmatprep.subr.bf16.mxu0 0
    %162 = vmatpush2.bf16.msra.mxu0 0
    %163 = vmatprep.subr.bf16.mxu0 0
    %164 = vmatpush2.bf16.msra.mxu0 0
    %165 = vmatprep.subr.bf16.mxu0 0
    %166 = vmatpush2.bf16.msra.mxu0 0
    %167 = vmatprep.subr.bf16.mxu0 0
    %168 = vmatpush2.bf16.msra.mxu0 0
    %169 = vmatprep.subr.bf16.mxu0 0
    %170 = vmatpush2.bf16.msra.mxu0 0
    %171 = vmatprep.subr.bf16.mxu0 0
    %172 = vmatpush2.bf16.msra.mxu0 0
    %173 = vmatprep.mubr.bf16.mxu0 0
    %174 = vmatmul.mubr.bf16.gmra.mxu0 %v139
    %v175 = vpop.f32.mrf.mxu0
    %v176 = vadd.f32 0.0, %v175
    %v177 = vpop.f32.mrf.mxu0
    %v178 = vpop.f32.mrf.mxu0
    %v179 = vadd.f32 0.0, %v178
    %v180 = vpop.f32.mrf.mxu0
    %181 = vdwg.mxu0
    %v182 = vxor.u32 %v176, 2147483648
    %v183 = vxor.u32 %v179, 2147483648
    %v184 = vmul.f32 %v182, 1.442695
    %v185 = vpow.pop %v184
    %v186 = vmul.f32 %v183, 1.442695
    %v187 = vpow.pop %v186
    %v188 = vadd.f32 %v185, 1.0
    %v189 = vadd.f32 %v187, 1.0
    %v190 = vrcp.pop %v188
    %v191 = vmul.f32 1.0, %v190
    %v192 = vrcp.pop %v189
    %v193 = vmul.f32 1.0, %v192
    %v194 = vmul.f32 %v176, %v191
    %v195 = vmul.f32 %v179, %v193
    %198 = vrot.lane.b32.xlu0 %v176, 64
    %v199 = vpop.permute.xlu0 %198
    %200 = vrot.lane.b32.xlu0 %v179, 64
    %v201 = vpop.permute.xlu0 %200
    %v204 = vmul.f32 %v194, %v199
    %v205 = vmul.f32 %v195, %v201
    %v206 = vpack.c.bf16 %v205, %v204
    %v207 = vld [vmem:[%s5] sm:$0xf]
    %v208 = vld [vmem:[%s5 + $0x4] sm:$0xf]
    %v209 = vld [vmem:[%s5 + $0x8] sm:$0xf]
    %v210 = vld [vmem:[%s5 + $0xc] sm:$0xf]
    %v211 = vld [vmem:[%s5 + $0x10] sm:$0xf]
    %v212 = vld [vmem:[%s5 + $0x14] sm:$0xf]
    %v213 = vld [vmem:[%s5 + $0x18] sm:$0xf]
    %v214 = vld [vmem:[%s5 + $0x1c] sm:$0xf]
    %v223 = vunpack.c.l.b16 %v207
    %v224 = vunpack.c.l.b16 %v208
    %v225 = vunpack.c.l.b16 %v209
    %v226 = vunpack.c.l.b16 %v210
    %v227 = vunpack.c.l.b16 %v211
    %v228 = vunpack.c.l.b16 %v212
    %v229 = vunpack.c.l.b16 %v213
    %v230 = vunpack.c.l.b16 %v214
    %v231 = vpack.c.b16 %v224, %v223
    %v232 = vpack.c.b16 %v226, %v225
    %v233 = vpack.c.b16 %v228, %v227
    %v234 = vpack.c.b16 %v230, %v229
    %vm239 = vcmask 523264
    %v241 = vsel %vm239, %v206, 0
    %243 = vmatprep.subr.bf16.mxu0 0
    %244 = vmatpush1.bf16.msra.mxu0 0
    %245 = vmatprep.subr.bf16.mxu0 0
    %246 = vmatpush1.bf16.msra.mxu0 0
    %247 = vmatprep.subr.bf16.mxu0 0
    %248 = vmatpush1.bf16.msra.mxu0 0
    %249 = vmatprep.subr.bf16.mxu0 0
    %250 = vmatpush1.bf16.msra.mxu0 0
    %251 = vmatprep.subr.bf16.mxu0 0
    %252 = vmatpush1.bf16.msra.mxu0 %v234
    %253 = vmatprep.subr.bf16.mxu0 0
    %254 = vmatpush1.bf16.msra.mxu0 %v233
    %255 = vmatprep.subr.bf16.mxu0 0
    %256 = vmatpush1.bf16.msra.mxu0 %v232
    %257 = vmatprep.subr.bf16.mxu0 0
    %258 = vmatpush1.bf16.msra.mxu0 %v231
    %259 = vmatprep.subr.bf16.mxu0 0
    %260 = vmatpush2.bf16.msra.mxu0 0
    %261 = vmatprep.subr.bf16.mxu0 0
    %262 = vmatpush2.bf16.msra.mxu0 0
    %263 = vmatprep.subr.bf16.mxu0 0
    %264 = vmatpush2.bf16.msra.mxu0 0
    %265 = vmatprep.subr.bf16.mxu0 0
    %266 = vmatpush2.bf16.msra.mxu0 0
    %267 = vmatprep.subr.bf16.mxu0 0
    %268 = vmatpush2.bf16.msra.mxu0 0
    %269 = vmatprep.subr.bf16.mxu0 0
    %270 = vmatpush2.bf16.msra.mxu0 0
    %271 = vmatprep.subr.bf16.mxu0 0
    %272 = vmatpush2.bf16.msra.mxu0 0
    %273 = vmatprep.subr.bf16.mxu0 0
    %274 = vmatpush2.bf16.msra.mxu0 0
    %275 = vmatprep.mubr.bf16.mxu0 0
    %276 = vmatmul.mubr.bf16.gmra.mxu0 %v241
    %v277 = vpop.f32.mrf.mxu0
    %v278 = vadd.f32 %v89, %v277
    %v279 = vpop.f32.mrf.mxu0
    %v280 = vpop.f32.mrf.mxu0
    %v281 = vadd.f32 %v92, %v280
    %v282 = vpop.f32.mrf.mxu0
    %283 = vdwg.mxu0
    %284 = vst.msk [vmem:[#allocation2] sm:$0xff] %vm50, %v278
    %285 = vst.msk [vmem:[#allocation2 + $0x8] sm:$0xff] %vm50, %v281
    // Predicated region
    $region26: #{qwen2_decoder_layer.5} parent=1 // pred_check
      _
    $region27: #{qwen2_decoder_layer.5} parent=1 // pred_check_branch
      %287 = sbr.rel (0) target = $region29
    $region28: #{qwen2_decoder_layer.5} parent=1 // pred_region
      %s289 = ssub.s32 256, 256
      %290 = vsyncadd [#allocation3], %s289
      %s291 = sshll.u32 [#allocation2], 4
      %s292 = int_to_ptr.vmem [resolvable:$true] %s291
      %297 = dma.vmem_to_hbm [thread:$0]  %s292, 256, %s6, [#allocation3], 128, 128, 8
    $region29: #{qwen2_decoder_layer.5} parent=1 // pred_fallthru
      _
    // Predicated region
    $region30: #{qwen2_decoder_layer.5} parent=1 // pred_check
      _
    $region31: #{qwen2_decoder_layer.5} parent=1 // pred_check_branch
      %299 = sbr.rel (0) target = $region33
    $region32: #{qwen2_decoder_layer.5} parent=1 // pred_region
      %300 = dma.done [#allocation3], 256
    $region33: #{qwen2_decoder_layer.5} parent=1 // pred_fallthru
      _
    %301 = vsyncpa [#allocation3], 1

</llo_original>
